<compile_context>
chip_gen: v5e
topology: v5e:2x2
jax: 0.10.0
libtpu: 0.0.40
codegen_flags: <defaults>
</compile_context>

<pallas_src>
import functools

import jax
import jax.numpy as jnp
from jax import lax
from jax.experimental import pallas as pl
from jax.experimental.pallas import tpu as pltpu

EPS = 1e-5


def _bn_kernel(x_ref, gamma_ref, beta_ref, o_ref, *, tc):
    # x_ref:      (N, tc, HW) f32  — this grid step's channel slab
    # gamma_ref:  (1, C, 1)  f32  — full, resident (constant index_map)
    # beta_ref:   (1, C, 1)  f32  — full, resident (constant index_map)
    # o_ref:      (N, tc, HW) f32
    i = pl.program_id(0)
    x = x_ref[...]
    n_elems = x.shape[0] * x.shape[2]
    inv_n = jnp.float32(1.0 / n_elems)

    # Two-pass batch statistics (numerically safe; block already in VMEM).
    mean = jnp.sum(x, axis=(0, 2), keepdims=True) * inv_n            # (1, tc, 1)
    centered = x - mean
    var = jnp.sum(centered * centered, axis=(0, 2), keepdims=True) * inv_n

    inv_std = lax.rsqrt(var + EPS)                                    # EUP slot

    # Slice this step's channel window out of the resident params.
    c0 = pl.multiple_of(i * tc, tc)
    gamma = gamma_ref[:, pl.ds(c0, tc), :]                            # (1, tc, 1)
    beta = beta_ref[:, pl.ds(c0, tc), :]                              # (1, tc, 1)

    scale = gamma * inv_std
    # Fused elementwise pass: one mul + one add per element (x is already
    # centered from the variance pass).
    o_ref[...] = centered * scale + beta


def _pick_channel_tile(C, target=432):
    """Largest divisor of C that is a multiple of 8 and <= target (else C)."""
    best = None
    d = 8
    while d <= min(C, target):
        if C % d == 0:
            best = d
        d += 8
    return best if best is not None else C


def batchnorm2d(x_nchw, gamma, beta):
    """Training-mode BatchNorm2d forward. x_nchw: (N, C, H, W) float32."""
    N, C, H, W = x_nchw.shape
    HW = H * W

    tc = _pick_channel_tile(C)          # 432 for C=864 -> grid of 2 steps
    grid = (C // tc,)

    x3 = x_nchw.reshape(N, C, HW).astype(jnp.float32)
    g = gamma.reshape(1, C, 1).astype(jnp.float32)
    b = beta.reshape(1, C, 1).astype(jnp.float32)

    n_el = N * C * HW
    cost = pl.CostEstimate(
        flops=5 * n_el,                     # sub, sq, add-reduce x2-ish, mul, add
        transcendentals=C,                  # one rsqrt per channel
        bytes_accessed=8 * n_el + 2 * 4 * C,
    )

    out3 = pl.pallas_call(
        functools.partial(_bn_kernel, tc=tc),
        out_shape=jax.ShapeDtypeStruct((N, C, HW), jnp.float32),
        grid=grid,
        in_specs=[
            pl.BlockSpec((N, tc, HW), lambda i: (0, i, 0)),
            pl.BlockSpec((1, C, 1), lambda i: (0, 0, 0)),   # resident params
            pl.BlockSpec((1, C, 1), lambda i: (0, 0, 0)),   # resident params
        ],
        out_specs=pl.BlockSpec((N, tc, HW), lambda i: (0, i, 0)),
        compiler_params=pltpu.CompilerParams(
            dimension_semantics=("parallel",),   # even 2-way split -> 1 block/TC on v7x
        ),
        cost_estimate=cost,
    )(x3, g, b)

    return out3.reshape(N, C, H, W)


def _reference(x_nchw, gamma, beta):
    mean = jnp.mean(x_nchw, axis=(0, 2, 3), keepdims=True)
    var = jnp.mean((x_nchw - mean) ** 2, axis=(0, 2, 3), keepdims=True)
    g = gamma.reshape(1, -1, 1, 1)
    b = beta.reshape(1, -1, 1, 1)
    return (x_nchw - mean) * lax.rsqrt(var + EPS) * g + b


if __name__ == "__main__":
    key = jax.random.PRNGKey(0)
    kx, kg, kb = jax.random.split(key, 3)

    # Shapes implied by the module: BatchNorm2d(864) on (1, 864, 14, 14).
    N, C, H, W = 1, 864, 14, 14
    x = jax.random.normal(kx, (N, C, H, W), dtype=jnp.float32)
    gamma = 1.0 + 0.1 * jax.random.normal(kg, (C,), dtype=jnp.float32)
    beta = 0.1 * jax.random.normal(kb, (C,), dtype=jnp.float32)

    out = batchnorm2d(x, gamma, beta)
    out = jax.block_until_ready(out)

    ref = _reference(x, gamma, beta)
    assert out.shape == (N, C, H, W)
    assert jnp.allclose(out, ref, atol=1e-4, rtol=1e-4)

    print("KERNEL_OK")
</pallas_src>

<mosaic_0001>
module attributes {stable_mosaic.version = 11 : i64} {
  func.func @_bn_kernel(%arg0: i32, %arg1: memref<1x432x196xf32, #tpu.memory_space<vmem>>, %arg2: memref<1x864x1xf32, #tpu.memory_space<vmem>>, %arg3: memref<1x864x1xf32, #tpu.memory_space<vmem>>, %arg4: memref<1x432x196xf32, #tpu.memory_space<vmem>>) attributes {dimension_semantics = [#tpu.dimension_semantics<parallel>], iteration_bounds = array<i64: 2>, scalar_prefetch = 0 : i64, scratch_operands = 0 : i64, tpu.core_type = #tpu.core_type<tc>, window_params = [{transform_indices = @transform_0, window_bounds = array<i64: 1, 432, 196>}, {pipeline_mode = #tpu.pipeline_mode<synchronous>, transform_indices = @transform_1, window_bounds = array<i64: 1, 864, 1>}, {pipeline_mode = #tpu.pipeline_mode<synchronous>, transform_indices = @transform_2, window_bounds = array<i64: 1, 864, 1>}, {transform_indices = @transform_3, window_bounds = array<i64: 1, 432, 196>}]} {
    %c0 = arith.constant 0 : index
    %c0_0 = arith.constant 0 : index
    %c0_1 = arith.constant 0 : index
    %0 = vector.load %arg1[%c0, %c0_0, %c0_1] : memref<1x432x196xf32, #tpu.memory_space<vmem>>, vector<1x432x196xf32>
    %cst = arith.constant dense<0.000000e+00> : vector<432xf32>
    %1 = vector.multi_reduction <add>, %0, %cst [0, 2] : vector<1x432x196xf32> to vector<432xf32>
    %2 = vector.shape_cast %1 : vector<432xf32> to vector<1x432x1xf32>
    %cst_2 = arith.constant 0.00510204071 : f32
    %3 = vector.broadcast %cst_2 : f32 to vector<1x432x1xf32>
    %4 = arith.mulf %2, %3 : vector<1x432x1xf32>
    %5 = vector.broadcast %4 : vector<1x432x1xf32> to vector<1x432x196xf32>
    %6 = arith.subf %0, %5 : vector<1x432x196xf32>
    %7 = arith.mulf %6, %6 : vector<1x432x196xf32>
    %cst_3 = arith.constant dense<0.000000e+00> : vector<432xf32>
    %8 = vector.multi_reduction <add>, %7, %cst_3 [0, 2] : vector<1x432x196xf32> to vector<432xf32>
    %9 = vector.shape_cast %8 : vector<432xf32> to vector<1x432x1xf32>
    %cst_4 = arith.constant 0.00510204071 : f32
    %10 = vector.broadcast %cst_4 : f32 to vector<1x432x1xf32>
    %11 = arith.mulf %9, %10 : vector<1x432x1xf32>
    %cst_5 = arith.constant 9.99999974E-6 : f32
    %12 = vector.broadcast %cst_5 : f32 to vector<1x432x1xf32>
    %13 = arith.addf %11, %12 : vector<1x432x1xf32>
    %14 = math.rsqrt %13 : vector<1x432x1xf32>
    %c432_i32 = arith.constant 432 : i32
    %15 = arith.muli %arg0, %c432_i32 : i32
    %16 = tpu.assume_multiple %15, 432 : i32
    %c0_6 = arith.constant 0 : index
    %17 = arith.index_cast %16 : i32 to index
    %c0_7 = arith.constant 0 : index
    %18 = vector.load %arg2[%c0_6, %17, %c0_7] : memref<1x864x1xf32, #tpu.memory_space<vmem>>, vector<1x432x1xf32>
    %c0_8 = arith.constant 0 : index
    %19 = arith.index_cast %16 : i32 to index
    %c0_9 = arith.constant 0 : index
    %20 = vector.load %arg3[%c0_8, %19, %c0_9] : memref<1x864x1xf32, #tpu.memory_space<vmem>>, vector<1x432x1xf32>
    %21 = arith.mulf %18, %14 : vector<1x432x1xf32>
    %22 = vector.broadcast %21 : vector<1x432x1xf32> to vector<1x432x196xf32>
    %23 = arith.mulf %6, %22 : vector<1x432x196xf32>
    %24 = vector.broadcast %20 : vector<1x432x1xf32> to vector<1x432x196xf32>
    %25 = arith.addf %23, %24 : vector<1x432x196xf32>
    %c0_10 = arith.constant 0 : index
    %c0_11 = arith.constant 0 : index
    %c0_12 = arith.constant 0 : index
    %26 = vector.load %arg4[%c0_10, %c0_11, %c0_12] : memref<1x432x196xf32, #tpu.memory_space<vmem>>, vector<1x432x196xf32>
    tpu.vector_store %arg4[%c0_10, %c0_11, %c0_12], %25 {strides = array<i32>} : memref<1x432x196xf32, #tpu.memory_space<vmem>>, vector<1x432x196xf32>,
    return
  }
  func.func @transform_0(%arg0: i32) -> (i32, i32, i32) {
    %c0_i32 = arith.constant 0 : i32
    %c0_i32_0 = arith.constant 0 : i32
    %c0_i32_1 = arith.constant 0 : i32
    return %c0_i32, %arg0, %c0_i32_0 : i32, i32, i32
  }
  func.func @transform_1(%arg0: i32) -> (i32, i32, i32) {
    %c0_i32 = arith.constant 0 : i32
    %c0_i32_0 = arith.constant 0 : i32
    %c0_i32_1 = arith.constant 0 : i32
    %c0_i32_2 = arith.constant 0 : i32
    return %c0_i32, %c0_i32_0, %c0_i32_1 : i32, i32, i32
  }
  func.func @transform_2(%arg0: i32) -> (i32, i32, i32) {
    %c0_i32 = arith.constant 0 : i32
    %c0_i32_0 = arith.constant 0 : i32
    %c0_i32_1 = arith.constant 0 : i32
    %c0_i32_2 = arith.constant 0 : i32
    return %c0_i32, %c0_i32_0, %c0_i32_1 : i32, i32, i32
  }
  func.func @transform_3(%arg0: i32) -> (i32, i32, i32) {
    %c0_i32 = arith.constant 0 : i32
    %c0_i32_0 = arith.constant 0 : i32
    %c0_i32_1 = arith.constant 0 : i32
    return %c0_i32, %arg0, %c0_i32_0 : i32, i32, i32
  }
}

</mosaic_0001>

<llo_original>
// kernel: tpu_custom_call.1
$region0: #{tpu_custom_call.1}
  #allocation0 [shape = 'u32[]', space=smem, size = 0x4, offset = 0x4, fixed_abs, tag = 'smem constant byte address 0x4 - core index']
  #allocation1 [shape = 'u32[72,128]{1,0:T(1,128)}', space=vmem, size = 0x9000, scoped, tag = 'internal scratch']
  %s0 = inlined_call_operand.vmem [shape: f32[1,864,196], index: 0, kind: input, shape index: {}]
  %s1 = inlined_call_operand.vmem [shape: f32[1,864,1], index: 1, kind: input, shape index: {}]
  %s2 = inlined_call_operand.vmem [shape: f32[1,864,1], index: 2, kind: input, shape index: {}]
  %s3 = inlined_call_operand.vmem [shape: f32[1,864,196], index: 3, kind: output, shape index: {}]
  %s4 = sld [smem:[#allocation0]]
  $region45: #{tpu_custom_call.1} parent=0
    _
  %s6 = ssub.s32 1, %s4
  %s7 = scalar_select 0, %s6, %s4
  loop: start=0, step=1, limit=4
  $region2: #{tpu_custom_call.1} parent=0 // loop_pre_header
    _
  $region3: #{tpu_custom_call.1} parent=0 // loop_header
    %s9 = sphi 0, %s13
    %p10 = scmp.ge.s32.totalorder %s9, 4
    %s19 = sphi 0, %s21
    %s22 = sphi 0, %s19
    %s23 = sphi 0, %s22
    %s39 = sphi 0, %s23
    %s43 = sphi 0, %s43
    %s45 = sphi 0, %s43
    %s46 = sphi 0, %s45
    %s60 = sphi 0, %s46
    %s64 = sphi 0, %s64
    %s66 = sphi 0, %s64
    %s67 = sphi 0, %s66
    %s81 = sphi 0, %s67
    %s87 = sphi 0, %s89
    %s90 = sphi 0, %s87
    %s91 = sphi 0, %s90
    %s107 = sphi 0, %s91
  $region4: #{tpu_custom_call.1} parent=0 // loop_header_branch
    %12 = sbr.rel (%p10) target = $region8
  $region5: #{tpu_custom_call.1} parent=0 // loop_body
    %s14 = ssub.s32 %s9, 1
    %s15 = ssub.s32 %s9, 2
    %s16 = sadd.s32 %s9, 1
    %s17 = ssub.s32 %s9, %s16
    %p18 = scmp.eq.s32.totalorder %s17, 0
    %s20 = sadd.s32 %s19, 1
    %s21 = scalar_select %p18, %s19, %s20
    %p24 = pneg %p18
    %p25 = scmp.eq.s32.totalorder %s9, 1
    %p26 = por %p24, %p25
    %p27 = scmp.ne.s32.totalorder %s19, %s22
    %p28 = scmp.eq.s32.totalorder %s9, 0
    %p29 = por %p27, %p28
    %p30 = scmp.ne.s32.totalorder %s19, %s22
    %p31 = scmp.eq.s32.totalorder %s14, 1
    %p32 = por %p30, %p31
    %p33 = scmp.ne.s32.totalorder %s22, %s23
    %p34 = scmp.eq.s32.totalorder %s14, 0
    %p35 = por %p33, %p34
    %p36 = scmp.ne.s32.totalorder %s22, %s23
    %p37 = scmp.eq.s32.totalorder %s15, 1
    %p38 = por %p36, %p37
    %p40 = scmp.ne.s32.totalorder %s23, %s39
    %p41 = scmp.eq.s32.totalorder %s15, 0
    %p42 = por %p40, %p41
    %s44 = sadd.s32 %s43, 1
    %p47 = scmp.eq.s32.totalorder %s9, 1
    %p48 = scmp.ne.s32.totalorder %s43, %s45
    %p49 = scmp.eq.s32.totalorder %s9, 0
    %p50 = por %p48, %p49
    %p51 = scmp.ne.s32.totalorder %s43, %s45
    %p52 = scmp.eq.s32.totalorder %s14, 1
    %p53 = por %p51, %p52
    %p54 = scmp.ne.s32.totalorder %s45, %s46
    %p55 = scmp.eq.s32.totalorder %s14, 0
    %p56 = por %p54, %p55
    %p57 = scmp.ne.s32.totalorder %s45, %s46
    %p58 = scmp.eq.s32.totalorder %s15, 1
    %p59 = por %p57, %p58
    %p61 = scmp.ne.s32.totalorder %s46, %s60
    %p62 = scmp.eq.s32.totalorder %s15, 0
    %p63 = por %p61, %p62
    %s65 = sadd.s32 %s64, 1
    %p68 = scmp.eq.s32.totalorder %s9, 1
    %p69 = scmp.ne.s32.totalorder %s64, %s66
    %p70 = scmp.eq.s32.totalorder %s9, 0
    %p71 = por %p69, %p70
    %p72 = scmp.ne.s32.totalorder %s64, %s66
    %p73 = scmp.eq.s32.totalorder %s14, 1
    %p74 = por %p72, %p73
    %p75 = scmp.ne.s32.totalorder %s66, %s67
    %p76 = scmp.eq.s32.totalorder %s14, 0
    %p77 = por %p75, %p76
    %p78 = scmp.ne.s32.totalorder %s66, %s67
    %p79 = scmp.eq.s32.totalorder %s15, 1
    %p80 = por %p78, %p79
    %p82 = scmp.ne.s32.totalorder %s67, %s81
    %p83 = scmp.eq.s32.totalorder %s15, 0
    %p84 = por %p82, %p83
    %s85 = ssub.s32 %s9, %s16
    %p86 = scmp.eq.s32.totalorder %s85, 0
    %s88 = sadd.s32 %s87, 1
    %s89 = scalar_select %p86, %s87, %s88
    %p92 = pneg %p86
    %p93 = scmp.eq.s32.totalorder %s9, 1
    %p94 = por %p92, %p93
    %p95 = scmp.ne.s32.totalorder %s87, %s90
    %p96 = scmp.eq.s32.totalorder %s9, 0
    %p97 = por %p95, %p96
    %p98 = scmp.ne.s32.totalorder %s87, %s90
    %p99 = scmp.eq.s32.totalorder %s14, 1
    %p100 = por %p98, %p99
    %p101 = scmp.ne.s32.totalorder %s90, %s91
    %p102 = scmp.eq.s32.totalorder %s14, 0
    %p103 = por %p101, %p102
    %p104 = scmp.ne.s32.totalorder %s90, %s91
    %p105 = scmp.eq.s32.totalorder %s15, 1
    %p106 = por %p104, %p105
    %p108 = scmp.ne.s32.totalorder %s91, %s107
    %p109 = scmp.eq.s32.totalorder %s15, 0
    %p110 = por %p108, %p109
    %p111 = scmp.le.s32.totalorder 1, %s9
    %p112 = scmp.lt.s32.totalorder %s9, 3
    %p113 = pnand %p111, %p112
    %p114 = pneg %p113
    // Predicated region
    $region9: #{tpu_custom_call.1} parent=5 // pred_check
      _
    $region10: #{tpu_custom_call.1} parent=5 // pred_check_branch
      %116 = sbr.rel (%p113) target = $region12
    $region11: #{tpu_custom_call.1} parent=5 // pred_region
      %s117 = ssub.s32 %s9, 1
      // Predicated region
      $region13: #{tpu_custom_call.1} parent=11 // pred_check
        %p118 = pneg %p56
      $region14: #{tpu_custom_call.1} parent=11 // pred_check_branch
        %120 = sbr.rel (%p118) target = $region16
      $region15: #{tpu_custom_call.1} parent=11 // pred_region
        _
      $region16: #{tpu_custom_call.1} parent=11 // pred_fallthru
        _
      // Predicated region
      $region17: #{tpu_custom_call.1} parent=11 // pred_check
        %p121 = pneg %p77
      $region18: #{tpu_custom_call.1} parent=11 // pred_check_branch
        %123 = sbr.rel (%p121) target = $region20
      $region19: #{tpu_custom_call.1} parent=11 // pred_region
        _
      $region20: #{tpu_custom_call.1} parent=11 // pred_fallthru
        _
    $region12: #{tpu_custom_call.1} parent=5 // pred_fallthru
      _
    %p124 = scmp.lt.s32.totalorder %s9, 2
    // Predicated region
    $region21: #{tpu_custom_call.1} parent=5 // pred_check
      %p125 = pneg %p124
    $region22: #{tpu_custom_call.1} parent=5 // pred_check_branch
      %127 = sbr.rel (%p125) target = $region24
    $region23: #{tpu_custom_call.1} parent=5 // pred_region
      // Predicated region
      $region25: #{tpu_custom_call.1} parent=23 // pred_check
        %p128 = pneg %p29
      $region26: #{tpu_custom_call.1} parent=23 // pred_check_branch
        %130 = sbr.rel (%p128) target = $region28
      $region27: #{tpu_custom_call.1} parent=23 // pred_region
        %s131 = smul.u32 54, %s9
        %p132 = scmp.lt.s32.totalorder %s131, 107
        %s133 = scalar_select %p132, %s131, 107
        %s134 = smul.addr %s133, 2
        %s135 = smul.addr %s134, 8
        %s136 = scalar_lea.vmem %s0, %s135
        %s137 = smul.u32 54, %s9
      $region28: #{tpu_custom_call.1} parent=23 // pred_fallthru
        _
    $region24: #{tpu_custom_call.1} parent=5 // pred_fallthru
      _
    %p138 = scmp.le.s32.totalorder 1, %s9
    %p139 = scmp.lt.s32.totalorder %s9, 3
    %p140 = pnand %p138, %p139
    %p141 = pneg %p140
    // Predicated region
    $region29: #{tpu_custom_call.1} parent=5 // pred_check
      _
    $region30: #{tpu_custom_call.1} parent=5 // pred_check_branch
      %143 = sbr.rel (%p140) target = $region32
    $region31: #{tpu_custom_call.1} parent=5 // pred_region
      %s144 = ssub.s32 %s9, 1
      %s145 = smul.u32 54, %s14
      %p146 = scmp.lt.s32.totalorder %s145, 107
      %s147 = scalar_select %p146, %s145, 107
      %s148 = smul.addr %s147, 2
      %s149 = smul.addr %s148, 8
      %s150 = scalar_lea.vmem %s0, %s149
      %p151 = pneg %p35
      %p152 = pneg %p32
      %p153 = pneg %p56
      %p154 = pneg %p53
      %p155 = pneg %p77
      %p156 = pneg %p74
      %p157 = pneg %p103
      %p158 = pneg %p100
      %s159 = smul.u32 54, %s14
      %p160 = scmp.lt.s32.totalorder %s159, 107
      %s161 = scalar_select %p160, %s159, 107
      %s162 = smul.addr %s161, 2
      %s163 = smul.addr %s162, 8
      %s164 = scalar_lea.vmem %s3, %s163
      %s165 = smul.u32 54, %s14
      %p166 = scmp.lt.s32.totalorder %s165, 107
      %s167 = scalar_select %p166, %s165, 107
      %s168 = smul.addr %s167, 2
      %s169 = smul.addr %s168, 8
      %s170 = scalar_lea.vmem %s0, %s169
      %s171 = smul.u32 54, %s14
      %s172 = smul.u32 54, %s14
      %p173 = scmp.lt.s32.totalorder %s172, 107
      %s174 = scalar_select %p173, %s172, 107
      %s175 = smul.addr %s174, 2
      %s176 = smul.addr %s175, 8
      %s177 = scalar_lea.vmem %s3, %s176
      %s178 = smul.u32 54, %s14
      %v179 = vld [vmem:[%s170] sm:$0xff]
      %v180 = vld [vmem:[%s170 + $0x8] sm:$0xff]
      %v181 = vld [vmem:[%s170 + $0x10] sm:$0xff]
      %v182 = vld [vmem:[%s170 + $0x18] sm:$0xff]
      %v183 = vld [vmem:[%s170 + $0x20] sm:$0xff]
      %v184 = vld [vmem:[%s170 + $0x28] sm:$0xff]
      %v185 = vld [vmem:[%s170 + $0x30] sm:$0xff]
      %v186 = vld [vmem:[%s170 + $0x38] sm:$0xff]
      %v187 = vld [vmem:[%s170 + $0x40] sm:$0xff]
      %v188 = vld [vmem:[%s170 + $0x48] sm:$0xff]
      %v189 = vld [vmem:[%s170 + $0x50] sm:$0xff]
      %v190 = vld [vmem:[%s170 + $0x58] sm:$0xff]
      %v191 = vld [vmem:[%s170 + $0x60] sm:$0xff]
      %v192 = vld [vmem:[%s170 + $0x68] sm:$0xff]
      %v193 = vld [vmem:[%s170 + $0x70] sm:$0xff]
      %v194 = vld [vmem:[%s170 + $0x78] sm:$0xff]
      %v195 = vld [vmem:[%s170 + $0x80] sm:$0xff]
      %v196 = vld [vmem:[%s170 + $0x88] sm:$0xff]
      %v197 = vld [vmem:[%s170 + $0x90] sm:$0xff]
      %v198 = vld [vmem:[%s170 + $0x98] sm:$0xff]
      %v199 = vld [vmem:[%s170 + $0xa0] sm:$0xff]
      %v200 = vld [vmem:[%s170 + $0xa8] sm:$0xff]
      %v201 = vld [vmem:[%s170 + $0xb0] sm:$0xff]
      %v202 = vld [vmem:[%s170 + $0xb8] sm:$0xff]
      %v203 = vld [vmem:[%s170 + $0xc0] sm:$0xff]
      %v204 = vld [vmem:[%s170 + $0xc8] sm:$0xff]
      %v205 = vld [vmem:[%s170 + $0xd0] sm:$0xff]
      %v206 = vld [vmem:[%s170 + $0xd8] sm:$0xff]
      %v207 = vld [vmem:[%s170 + $0xe0] sm:$0xff]
      %v208 = vld [vmem:[%s170 + $0xe8] sm:$0xff]
      %v209 = vld [vmem:[%s170 + $0xf0] sm:$0xff]
      %v210 = vld [vmem:[%s170 + $0xf8] sm:$0xff]
      %v211 = vld [vmem:[%s170 + $0x100] sm:$0xff]
      %v212 = vld [vmem:[%s170 + $0x108] sm:$0xff]
      %v213 = vld [vmem:[%s170 + $0x110] sm:$0xff]
      %v214 = vld [vmem:[%s170 + $0x118] sm:$0xff]
      %v215 = vld [vmem:[%s170 + $0x120] sm:$0xff]
      %v216 = vld [vmem:[%s170 + $0x128] sm:$0xff]
      %v217 = vld [vmem:[%s170 + $0x130] sm:$0xff]
      %v218 = vld [vmem:[%s170 + $0x138] sm:$0xff]
      %v219 = vld [vmem:[%s170 + $0x140] sm:$0xff]
      %v220 = vld [vmem:[%s170 + $0x148] sm:$0xff]
      %v221 = vld [vmem:[%s170 + $0x150] sm:$0xff]
      %v222 = vld [vmem:[%s170 + $0x158] sm:$0xff]
      %v223 = vld [vmem:[%s170 + $0x160] sm:$0xff]
      %v224 = vld [vmem:[%s170 + $0x168] sm:$0xff]
      %v225 = vld [vmem:[%s170 + $0x170] sm:$0xff]
      %v226 = vld [vmem:[%s170 + $0x178] sm:$0xff]
      %v227 = vld [vmem:[%s170 + $0x180] sm:$0xff]
      %v228 = vld [vmem:[%s170 + $0x188] sm:$0xff]
      %v229 = vld [vmem:[%s170 + $0x190] sm:$0xff]
      %v230 = vld [vmem:[%s170 + $0x198] sm:$0xff]
      %v231 = vld [vmem:[%s170 + $0x1a0] sm:$0xff]
      %v232 = vld [vmem:[%s170 + $0x1a8] sm:$0xff]
      %v233 = vld [vmem:[%s170 + $0x1b0] sm:$0xff]
      %v234 = vld [vmem:[%s170 + $0x1b8] sm:$0xff]
      %v235 = vld [vmem:[%s170 + $0x1c0] sm:$0xff]
      %v236 = vld [vmem:[%s170 + $0x1c8] sm:$0xff]
      %v237 = vld [vmem:[%s170 + $0x1d0] sm:$0xff]
      %v238 = vld [vmem:[%s170 + $0x1d8] sm:$0xff]
      %v239 = vld [vmem:[%s170 + $0x1e0] sm:$0xff]
      %v240 = vld [vmem:[%s170 + $0x1e8] sm:$0xff]
      %v241 = vld [vmem:[%s170 + $0x1f0] sm:$0xff]
      %v242 = vld [vmem:[%s170 + $0x1f8] sm:$0xff]
      %v243 = vld [vmem:[%s170 + $0x200] sm:$0xff]
      %v244 = vld [vmem:[%s170 + $0x208] sm:$0xff]
      %v245 = vld [vmem:[%s170 + $0x210] sm:$0xff]
      %v246 = vld [vmem:[%s170 + $0x218] sm:$0xff]
      %v247 = vld [vmem:[%s170 + $0x220] sm:$0xff]
      %v248 = vld [vmem:[%s170 + $0x228] sm:$0xff]
      %v249 = vld [vmem:[%s170 + $0x230] sm:$0xff]
      %v250 = vld [vmem:[%s170 + $0x238] sm:$0xff]
      %v251 = vld [vmem:[%s170 + $0x240] sm:$0xff]
      %v252 = vld [vmem:[%s170 + $0x248] sm:$0xff]
      %v253 = vld [vmem:[%s170 + $0x250] sm:$0xff]
      %v254 = vld [vmem:[%s170 + $0x258] sm:$0xff]
      %v255 = vld [vmem:[%s170 + $0x260] sm:$0xff]
      %v256 = vld [vmem:[%s170 + $0x268] sm:$0xff]
      %v257 = vld [vmem:[%s170 + $0x270] sm:$0xff]
      %v258 = vld [vmem:[%s170 + $0x278] sm:$0xff]
      %v259 = vld [vmem:[%s170 + $0x280] sm:$0xff]
      %v260 = vld [vmem:[%s170 + $0x288] sm:$0xff]
      %v261 = vld [vmem:[%s170 + $0x290] sm:$0xff]
      %v262 = vld [vmem:[%s170 + $0x298] sm:$0xff]
      %v263 = vld [vmem:[%s170 + $0x2a0] sm:$0xff]
      %v264 = vld [vmem:[%s170 + $0x2a8] sm:$0xff]
      %v265 = vld [vmem:[%s170 + $0x2b0] sm:$0xff]
      %v266 = vld [vmem:[%s170 + $0x2b8] sm:$0xff]
      %v267 = vld [vmem:[%s170 + $0x2c0] sm:$0xff]
      %v268 = vld [vmem:[%s170 + $0x2c8] sm:$0xff]
      %v269 = vld [vmem:[%s170 + $0x2d0] sm:$0xff]
      %v270 = vld [vmem:[%s170 + $0x2d8] sm:$0xff]
      %v271 = vld [vmem:[%s170 + $0x2e0] sm:$0xff]
      %v272 = vld [vmem:[%s170 + $0x2e8] sm:$0xff]
      %v273 = vld [vmem:[%s170 + $0x2f0] sm:$0xff]
      %v274 = vld [vmem:[%s170 + $0x2f8] sm:$0xff]
      %v275 = vld [vmem:[%s170 + $0x300] sm:$0xff]
      %v276 = vld [vmem:[%s170 + $0x308] sm:$0xff]
      %v277 = vld [vmem:[%s170 + $0x310] sm:$0xff]
      %v278 = vld [vmem:[%s170 + $0x318] sm:$0xff]
      %v279 = vld [vmem:[%s170 + $0x320] sm:$0xff]
      %v280 = vld [vmem:[%s170 + $0x328] sm:$0xff]
      %v281 = vld [vmem:[%s170 + $0x330] sm:$0xff]
      %v282 = vld [vmem:[%s170 + $0x338] sm:$0xff]
      %v283 = vld [vmem:[%s170 + $0x340] sm:$0xff]
      %v284 = vld [vmem:[%s170 + $0x348] sm:$0xff]
      %v285 = vld [vmem:[%s170 + $0x350] sm:$0xff]
      %v286 = vld [vmem:[%s170 + $0x358] sm:$0xff]
      %vm287 = vcmask 556032
      %v288 = vsel %vm287, %v180, 0.0
      %v289 = vadd.f32 %v179, %v288
      %290 = vadd.xlane.f32.xlu0 %v289
      %v291 = vpop.xlane.xlu0 %290
      %v292 = vsel %vm287, %v182, 0.0
      %v293 = vadd.f32 %v181, %v292
      %294 = vadd.xlane.f32.xlu0 %v293
      %v295 = vpop.xlane.xlu0 %294
      %v296 = vsel %vm287, %v184, 0.0
      %v297 = vadd.f32 %v183, %v296
      %298 = vadd.xlane.f32.xlu0 %v297
      %v299 = vpop.xlane.xlu0 %298
      %v300 = vsel %vm287, %v186, 0.0
      %v301 = vadd.f32 %v185, %v300
      %302 = vadd.xlane.f32.xlu0 %v301
      %v303 = vpop.xlane.xlu0 %302
      %v304 = vsel %vm287, %v188, 0.0
      %v305 = vadd.f32 %v187, %v304
      %306 = vadd.xlane.f32.xlu0 %v305
      %v307 = vpop.xlane.xlu0 %306
      %v308 = vsel %vm287, %v190, 0.0
      %v309 = vadd.f32 %v189, %v308
      %310 = vadd.xlane.f32.xlu0 %v309
      %v311 = vpop.xlane.xlu0 %310
      %v312 = vsel %vm287, %v192, 0.0
      %v313 = vadd.f32 %v191, %v312
      %314 = vadd.xlane.f32.xlu0 %v313
      %v315 = vpop.xlane.xlu0 %314
      %v316 = vsel %vm287, %v194, 0.0
      %v317 = vadd.f32 %v193, %v316
      %318 = vadd.xlane.f32.xlu0 %v317
      %v319 = vpop.xlane.xlu0 %318
      %v320 = vsel %vm287, %v196, 0.0
      %v321 = vadd.f32 %v195, %v320
      %322 = vadd.xlane.f32.xlu0 %v321
      %v323 = vpop.xlane.xlu0 %322
      %v324 = vsel %vm287, %v198, 0.0
      %v325 = vadd.f32 %v197, %v324
      %326 = vadd.xlane.f32.xlu0 %v325
      %v327 = vpop.xlane.xlu0 %326
      %v328 = vsel %vm287, %v200, 0.0
      %v329 = vadd.f32 %v199, %v328
      %330 = vadd.xlane.f32.xlu0 %v329
      %v331 = vpop.xlane.xlu0 %330
      %v332 = vsel %vm287, %v202, 0.0
      %v333 = vadd.f32 %v201, %v332
      %334 = vadd.xlane.f32.xlu0 %v333
      %v335 = vpop.xlane.xlu0 %334
      %v336 = vsel %vm287, %v204, 0.0
      %v337 = vadd.f32 %v203, %v336
      %338 = vadd.xlane.f32.xlu0 %v337
      %v339 = vpop.xlane.xlu0 %338
      %v340 = vsel %vm287, %v206, 0.0
      %v341 = vadd.f32 %v205, %v340
      %342 = vadd.xlane.f32.xlu0 %v341
      %v343 = vpop.xlane.xlu0 %342
      %v344 = vsel %vm287, %v208, 0.0
      %v345 = vadd.f32 %v207, %v344
      %346 = vadd.xlane.f32.xlu0 %v345
      %v347 = vpop.xlane.xlu0 %346
      %v348 = vsel %vm287, %v210, 0.0
      %v349 = vadd.f32 %v209, %v348
      %350 = vadd.xlane.f32.xlu0 %v349
      %v351 = vpop.xlane.xlu0 %350
      %v352 = vsel %vm287, %v212, 0.0
      %v353 = vadd.f32 %v211, %v352
      %354 = vadd.xlane.f32.xlu0 %v353
      %v355 = vpop.xlane.xlu0 %354
      %v356 = vsel %vm287, %v214, 0.0
      %v357 = vadd.f32 %v213, %v356
      %358 = vadd.xlane.f32.xlu0 %v357
      %v359 = vpop.xlane.xlu0 %358
      %v360 = vsel %vm287, %v216, 0.0
      %v361 = vadd.f32 %v215, %v360
      %362 = vadd.xlane.f32.xlu0 %v361
      %v363 = vpop.xlane.xlu0 %362
      %v364 = vsel %vm287, %v218, 0.0
      %v365 = vadd.f32 %v217, %v364
      %366 = vadd.xlane.f32.xlu0 %v365
      %v367 = vpop.xlane.xlu0 %366
      %v368 = vsel %vm287, %v220, 0.0
      %v369 = vadd.f32 %v219, %v368
      %370 = vadd.xlane.f32.xlu0 %v369
      %v371 = vpop.xlane.xlu0 %370
      %v372 = vsel %vm287, %v222, 0.0
      %v373 = vadd.f32 %v221, %v372
      %374 = vadd.xlane.f32.xlu0 %v373
      %v375 = vpop.xlane.xlu0 %374
      %v376 = vsel %vm287, %v224, 0.0
      %v377 = vadd.f32 %v223, %v376
      %378 = vadd.xlane.f32.xlu0 %v377
      %v379 = vpop.xlane.xlu0 %378
      %v380 = vsel %vm287, %v226, 0.0
      %v381 = vadd.f32 %v225, %v380
      %382 = vadd.xlane.f32.xlu0 %v381
      %v383 = vpop.xlane.xlu0 %382
      %v384 = vsel %vm287, %v228, 0.0
      %v385 = vadd.f32 %v227, %v384
      %386 = vadd.xlane.f32.xlu0 %v385
      %v387 = vpop.xlane.xlu0 %386
      %v388 = vsel %vm287, %v230, 0.0
      %v389 = vadd.f32 %v229, %v388
      %390 = vadd.xlane.f32.xlu0 %v389
      %v391 = vpop.xlane.xlu0 %390
      %v392 = vsel %vm287, %v232, 0.0
      %v393 = vadd.f32 %v231, %v392
      %394 = vadd.xlane.f32.xlu0 %v393
      %v395 = vpop.xlane.xlu0 %394
      %v396 = vsel %vm287, %v234, 0.0
      %v397 = vadd.f32 %v233, %v396
      %398 = vadd.xlane.f32.xlu0 %v397
      %v399 = vpop.xlane.xlu0 %398
      %v400 = vsel %vm287, %v236, 0.0
      %v401 = vadd.f32 %v235, %v400
      %402 = vadd.xlane.f32.xlu0 %v401
      %v403 = vpop.xlane.xlu0 %402
      %v404 = vsel %vm287, %v238, 0.0
      %v405 = vadd.f32 %v237, %v404
      %406 = vadd.xlane.f32.xlu0 %v405
      %v407 = vpop.xlane.xlu0 %406
      %v408 = vsel %vm287, %v240, 0.0
      %v409 = vadd.f32 %v239, %v408
      %410 = vadd.xlane.f32.xlu0 %v409
      %v411 = vpop.xlane.xlu0 %410
      %v412 = vsel %vm287, %v242, 0.0
      %v413 = vadd.f32 %v241, %v412
      %414 = vadd.xlane.f32.xlu0 %v413
      %v415 = vpop.xlane.xlu0 %414
      %v416 = vsel %vm287, %v244, 0.0
      %v417 = vadd.f32 %v243, %v416
      %418 = vadd.xlane.f32.xlu0 %v417
      %v419 = vpop.xlane.xlu0 %418
      %v420 = vsel %vm287, %v246, 0.0
      %v421 = vadd.f32 %v245, %v420
      %422 = vadd.xlane.f32.xlu0 %v421
      %v423 = vpop.xlane.xlu0 %422
      %v424 = vsel %vm287, %v248, 0.0
      %v425 = vadd.f32 %v247, %v424
      %426 = vadd.xlane.f32.xlu0 %v425
      %v427 = vpop.xlane.xlu0 %426
      %v428 = vsel %vm287, %v250, 0.0
      %v429 = vadd.f32 %v249, %v428
      %430 = vadd.xlane.f32.xlu0 %v429
      %v431 = vpop.xlane.xlu0 %430
      %v432 = vsel %vm287, %v252, 0.0
      %v433 = vadd.f32 %v251, %v432
      %434 = vadd.xlane.f32.xlu0 %v433
      %v435 = vpop.xlane.xlu0 %434
      %v436 = vsel %vm287, %v254, 0.0
      %v437 = vadd.f32 %v253, %v436
      %438 = vadd.xlane.f32.xlu0 %v437
      %v439 = vpop.xlane.xlu0 %438
      %v440 = vsel %vm287, %v256, 0.0
      %v441 = vadd.f32 %v255, %v440
      %442 = vadd.xlane.f32.xlu0 %v441
      %v443 = vpop.xlane.xlu0 %442
      %v444 = vsel %vm287, %v258, 0.0
      %v445 = vadd.f32 %v257, %v444
      %446 = vadd.xlane.f32.xlu0 %v445
      %v447 = vpop.xlane.xlu0 %446
      %v448 = vsel %vm287, %v260, 0.0
      %v449 = vadd.f32 %v259, %v448
      %450 = vadd.xlane.f32.xlu0 %v449
      %v451 = vpop.xlane.xlu0 %450
      %v452 = vsel %vm287, %v262, 0.0
      %v453 = vadd.f32 %v261, %v452
      %454 = vadd.xlane.f32.xlu0 %v453
      %v455 = vpop.xlane.xlu0 %454
      %v456 = vsel %vm287, %v264, 0.0
      %v457 = vadd.f32 %v263, %v456
      %458 = vadd.xlane.f32.xlu0 %v457
      %v459 = vpop.xlane.xlu0 %458
      %v460 = vsel %vm287, %v266, 0.0
      %v461 = vadd.f32 %v265, %v460
      %462 = vadd.xlane.f32.xlu0 %v461
      %v463 = vpop.xlane.xlu0 %462
      %v464 = vsel %vm287, %v268, 0.0
      %v465 = vadd.f32 %v267, %v464
      %466 = vadd.xlane.f32.xlu0 %v465
      %v467 = vpop.xlane.xlu0 %466
      %v468 = vsel %vm287, %v270, 0.0
      %v469 = vadd.f32 %v269, %v468
      %470 = vadd.xlane.f32.xlu0 %v469
      %v471 = vpop.xlane.xlu0 %470
      %v472 = vsel %vm287, %v272, 0.0
      %v473 = vadd.f32 %v271, %v472
      %474 = vadd.xlane.f32.xlu0 %v473
      %v475 = vpop.xlane.xlu0 %474
      %v476 = vsel %vm287, %v274, 0.0
      %v477 = vadd.f32 %v273, %v476
      %478 = vadd.xlane.f32.xlu0 %v477
      %v479 = vpop.xlane.xlu0 %478
      %v480 = vsel %vm287, %v276, 0.0
      %v481 = vadd.f32 %v275, %v480
      %482 = vadd.xlane.f32.xlu0 %v481
      %v483 = vpop.xlane.xlu0 %482
      %v484 = vsel %vm287, %v278, 0.0
      %v485 = vadd.f32 %v277, %v484
      %486 = vadd.xlane.f32.xlu0 %v485
      %v487 = vpop.xlane.xlu0 %486
      %v488 = vsel %vm287, %v280, 0.0
      %v489 = vadd.f32 %v279, %v488
      %490 = vadd.xlane.f32.xlu0 %v489
      %v491 = vpop.xlane.xlu0 %490
      %v492 = vsel %vm287, %v282, 0.0
      %v493 = vadd.f32 %v281, %v492
      %494 = vadd.xlane.f32.xlu0 %v493
      %v495 = vpop.xlane.xlu0 %494
      %v496 = vsel %vm287, %v284, 0.0
      %v497 = vadd.f32 %v283, %v496
      %498 = vadd.xlane.f32.xlu0 %v497
      %v499 = vpop.xlane.xlu0 %498
      %v500 = vsel %vm287, %v286, 0.0
      %v501 = vadd.f32 %v285, %v500
      %502 = vadd.xlane.f32.xlu0 %v501
      %v503 = vpop.xlane.xlu0 %502
      %v504 = vmul.f32 %v291, 0.0051020407
      %v505 = vmul.f32 %v295, 0.0051020407
      %v506 = vmul.f32 %v299, 0.0051020407
      %v507 = vmul.f32 %v303, 0.0051020407
      %v508 = vmul.f32 %v307, 0.0051020407
      %v509 = vmul.f32 %v311, 0.0051020407
      %v510 = vmul.f32 %v315, 0.0051020407
      %v511 = vmul.f32 %v319, 0.0051020407
      %v512 = vmul.f32 %v323, 0.0051020407
      %v513 = vmul.f32 %v327, 0.0051020407
      %v514 = vmul.f32 %v331, 0.0051020407
      %v515 = vmul.f32 %v335, 0.0051020407
      %v516 = vmul.f32 %v339, 0.0051020407
      %v517 = vmul.f32 %v343, 0.0051020407
      %v518 = vmul.f32 %v347, 0.0051020407
      %v519 = vmul.f32 %v351, 0.0051020407
      %v520 = vmul.f32 %v355, 0.0051020407
      %v521 = vmul.f32 %v359, 0.0051020407
      %v522 = vmul.f32 %v363, 0.0051020407
      %v523 = vmul.f32 %v367, 0.0051020407
      %v524 = vmul.f32 %v371, 0.0051020407
      %v525 = vmul.f32 %v375, 0.0051020407
      %v526 = vmul.f32 %v379, 0.0051020407
      %v527 = vmul.f32 %v383, 0.0051020407
      %v528 = vmul.f32 %v387, 0.0051020407
      %v529 = vmul.f32 %v391, 0.0051020407
      %v530 = vmul.f32 %v395, 0.0051020407
      %v531 = vmul.f32 %v399, 0.0051020407
      %v532 = vmul.f32 %v403, 0.0051020407
      %v533 = vmul.f32 %v407, 0.0051020407
      %v534 = vmul.f32 %v411, 0.0051020407
      %v535 = vmul.f32 %v415, 0.0051020407
      %v536 = vmul.f32 %v419, 0.0051020407
      %v537 = vmul.f32 %v423, 0.0051020407
      %v538 = vmul.f32 %v427, 0.0051020407
      %v539 = vmul.f32 %v431, 0.0051020407
      %v540 = vmul.f32 %v435, 0.0051020407
      %v541 = vmul.f32 %v439, 0.0051020407
      %v542 = vmul.f32 %v443, 0.0051020407
      %v543 = vmul.f32 %v447, 0.0051020407
      %v544 = vmul.f32 %v451, 0.0051020407
      %v545 = vmul.f32 %v455, 0.0051020407
      %v546 = vmul.f32 %v459, 0.0051020407
      %v547 = vmul.f32 %v463, 0.0051020407
      %v548 = vmul.f32 %v467, 0.0051020407
      %v549 = vmul.f32 %v471, 0.0051020407
      %v550 = vmul.f32 %v475, 0.0051020407
      %v551 = vmul.f32 %v479, 0.0051020407
      %v552 = vmul.f32 %v483, 0.0051020407
      %v553 = vmul.f32 %v487, 0.0051020407
      %v554 = vmul.f32 %v491, 0.0051020407
      %v555 = vmul.f32 %v495, 0.0051020407
      %v556 = vmul.f32 %v499, 0.0051020407
      %v557 = vmul.f32 %v503, 0.0051020407
      %v558 = vsub.f32 %v179, %v504
      %v559 = vsub.f32 %v180, %v504
      %v560 = vsub.f32 %v181, %v505
      %v561 = vsub.f32 %v182, %v505
      %v562 = vsub.f32 %v183, %v506
      %v563 = vsub.f32 %v184, %v506
      %v564 = vsub.f32 %v185, %v507
      %v565 = vsub.f32 %v186, %v507
      %v566 = vsub.f32 %v187, %v508
      %v567 = vsub.f32 %v188, %v508
      %v568 = vsub.f32 %v189, %v509
      %v569 = vsub.f32 %v190, %v509
      %v570 = vsub.f32 %v191, %v510
      %v571 = vsub.f32 %v192, %v510
      %v572 = vsub.f32 %v193, %v511
      %v573 = vsub.f32 %v194, %v511
      %v574 = vsub.f32 %v195, %v512
      %v575 = vsub.f32 %v196, %v512
      %v576 = vsub.f32 %v197, %v513
      %v577 = vsub.f32 %v198, %v513
      %v578 = vsub.f32 %v199, %v514
      %v579 = vsub.f32 %v200, %v514
      %v580 = vsub.f32 %v201, %v515
      %v581 = vsub.f32 %v202, %v515
      %v582 = vsub.f32 %v203, %v516
      %v583 = vsub.f32 %v204, %v516
      %v584 = vsub.f32 %v205, %v517
      %v585 = vsub.f32 %v206, %v517
      %v586 = vsub.f32 %v207, %v518
      %v587 = vsub.f32 %v208, %v518
      %v588 = vsub.f32 %v209, %v519
      %v589 = vsub.f32 %v210, %v519
      %v590 = vsub.f32 %v211, %v520
      %v591 = vsub.f32 %v212, %v520
      %v592 = vsub.f32 %v213, %v521
      %v593 = vsub.f32 %v214, %v521
      %v594 = vsub.f32 %v215, %v522
      %v595 = vsub.f32 %v216, %v522
      %v596 = vsub.f32 %v217, %v523
      %v597 = vsub.f32 %v218, %v523
      %v598 = vsub.f32 %v219, %v524
      %v599 = vsub.f32 %v220, %v524
      %v600 = vsub.f32 %v221, %v525
      %v601 = vsub.f32 %v222, %v525
      %v602 = vsub.f32 %v223, %v526
      %v603 = vsub.f32 %v224, %v526
      %v604 = vsub.f32 %v225, %v527
      %v605 = vsub.f32 %v226, %v527
      %v606 = vsub.f32 %v227, %v528
      %v607 = vsub.f32 %v228, %v528
      %v608 = vsub.f32 %v229, %v529
      %v609 = vsub.f32 %v230, %v529
      %v610 = vsub.f32 %v231, %v530
      %v611 = vsub.f32 %v232, %v530
      %v612 = vsub.f32 %v233, %v531
      %v613 = vsub.f32 %v234, %v531
      %v614 = vsub.f32 %v235, %v532
      %v615 = vsub.f32 %v236, %v532
      %v616 = vsub.f32 %v237, %v533
      %v617 = vsub.f32 %v238, %v533
      %v618 = vsub.f32 %v239, %v534
      %v619 = vsub.f32 %v240, %v534
      %v620 = vsub.f32 %v241, %v535
      %v621 = vsub.f32 %v242, %v535
      %v622 = vsub.f32 %v243, %v536
      %v623 = vsub.f32 %v244, %v536
      %v624 = vsub.f32 %v245, %v537
      %v625 = vsub.f32 %v246, %v537
      %v626 = vsub.f32 %v247, %v538
      %v627 = vsub.f32 %v248, %v538
      %v628 = vsub.f32 %v249, %v539
      %v629 = vsub.f32 %v250, %v539
      %v630 = vsub.f32 %v251, %v540
      %v631 = vsub.f32 %v252, %v540
      %v632 = vsub.f32 %v253, %v541
      %v633 = vsub.f32 %v254, %v541
      %v634 = vsub.f32 %v255, %v542
      %v635 = vsub.f32 %v256, %v542
      %v636 = vsub.f32 %v257, %v543
      %v637 = vsub.f32 %v258, %v543
      %v638 = vsub.f32 %v259, %v544
      %v639 = vsub.f32 %v260, %v544
      %v640 = vsub.f32 %v261, %v545
      %v641 = vsub.f32 %v262, %v545
      %v642 = vsub.f32 %v263, %v546
      %v643 = vsub.f32 %v264, %v546
      %v644 = vsub.f32 %v265, %v547
      %v645 = vsub.f32 %v266, %v547
      %v646 = vsub.f32 %v267, %v548
      %v647 = vsub.f32 %v268, %v548
      %v648 = vsub.f32 %v269, %v549
      %v649 = vsub.f32 %v270, %v549
      %v650 = vsub.f32 %v271, %v550
      %v651 = vsub.f32 %v272, %v550
      %v652 = vsub.f32 %v273, %v551
      %v653 = vsub.f32 %v274, %v551
      %v654 = vsub.f32 %v275, %v552
      %v655 = vsub.f32 %v276, %v552
      %v656 = vsub.f32 %v277, %v553
      %v657 = vsub.f32 %v278, %v553
      %v658 = vsub.f32 %v279, %v554
      %v659 = vsub.f32 %v280, %v554
      %v660 = vsub.f32 %v281, %v555
      %v661 = vsub.f32 %v282, %v555
      %v662 = vsub.f32 %v283, %v556
      %v663 = vsub.f32 %v284, %v556
      %v664 = vsub.f32 %v285, %v557
      %v665 = vsub.f32 %v286, %v557
      %v666 = vmul.f32 %v558, %v558
      %v667 = vmul.f32 %v559, %v559
      %v668 = vmul.f32 %v560, %v560
      %v669 = vmul.f32 %v561, %v561
      %v670 = vmul.f32 %v562, %v562
      %v671 = vmul.f32 %v563, %v563
      %v672 = vmul.f32 %v564, %v564
      %v673 = vmul.f32 %v565, %v565
      %v674 = vmul.f32 %v566, %v566
      %v675 = vmul.f32 %v567, %v567
      %v676 = vmul.f32 %v568, %v568
      %v677 = vmul.f32 %v569, %v569
      %v678 = vmul.f32 %v570, %v570
      %v679 = vmul.f32 %v571, %v571
      %v680 = vmul.f32 %v572, %v572
      %v681 = vmul.f32 %v573, %v573
      %v682 = vmul.f32 %v574, %v574
      %v683 = vmul.f32 %v575, %v575
      %v684 = vmul.f32 %v576, %v576
      %v685 = vmul.f32 %v577, %v577
      %v686 = vmul.f32 %v578, %v578
      %v687 = vmul.f32 %v579, %v579
      %v688 = vmul.f32 %v580, %v580
      %v689 = vmul.f32 %v581, %v581
      %v690 = vmul.f32 %v582, %v582
      %v691 = vmul.f32 %v583, %v583
      %v692 = vmul.f32 %v584, %v584
      %v693 = vmul.f32 %v585, %v585
      %v694 = vmul.f32 %v586, %v586
      %v695 = vmul.f32 %v587, %v587
      %v696 = vmul.f32 %v588, %v588
      %v697 = vmul.f32 %v589, %v589
      %v698 = vmul.f32 %v590, %v590
      %v699 = vmul.f32 %v591, %v591
      %v700 = vmul.f32 %v592, %v592
      %v701 = vmul.f32 %v593, %v593
      %v702 = vmul.f32 %v594, %v594
      %v703 = vmul.f32 %v595, %v595
      %v704 = vmul.f32 %v596, %v596
      %v705 = vmul.f32 %v597, %v597
      %v706 = vmul.f32 %v598, %v598
      %v707 = vmul.f32 %v599, %v599
      %v708 = vmul.f32 %v600, %v600
      %v709 = vmul.f32 %v601, %v601
      %v710 = vmul.f32 %v602, %v602
      %v711 = vmul.f32 %v603, %v603
      %v712 = vmul.f32 %v604, %v604
      %v713 = vmul.f32 %v605, %v605
      %v714 = vmul.f32 %v606, %v606
      %v715 = vmul.f32 %v607, %v607
      %v716 = vmul.f32 %v608, %v608
      %v717 = vmul.f32 %v609, %v609
      %v718 = vmul.f32 %v610, %v610
      %v719 = vmul.f32 %v611, %v611
      %v720 = vmul.f32 %v612, %v612
      %v721 = vmul.f32 %v613, %v613
      %v722 = vmul.f32 %v614, %v614
      %v723 = vmul.f32 %v615, %v615
      %v724 = vmul.f32 %v616, %v616
      %v725 = vmul.f32 %v617, %v617
      %v726 = vmul.f32 %v618, %v618
      %v727 = vmul.f32 %v619, %v619
      %v728 = vmul.f32 %v620, %v620
      %v729 = vmul.f32 %v621, %v621
      %v730 = vmul.f32 %v622, %v622
      %v731 = vmul.f32 %v623, %v623
      %v732 = vmul.f32 %v624, %v624
      %v733 = vmul.f32 %v625, %v625
      %v734 = vmul.f32 %v626, %v626
      %v735 = vmul.f32 %v627, %v627
      %v736 = vmul.f32 %v628, %v628
      %v737 = vmul.f32 %v629, %v629
      %v738 = vmul.f32 %v630, %v630
      %v739 = vmul.f32 %v631, %v631
      %v740 = vmul.f32 %v632, %v632
      %v741 = vmul.f32 %v633, %v633
      %v742 = vmul.f32 %v634, %v634
      %v743 = vmul.f32 %v635, %v635
      %v744 = vmul.f32 %v636, %v636
      %v745 = vmul.f32 %v637, %v637
      %v746 = vmul.f32 %v638, %v638
      %v747 = vmul.f32 %v639, %v639
      %v748 = vmul.f32 %v640, %v640
      %v749 = vmul.f32 %v641, %v641
      %v750 = vmul.f32 %v642, %v642
      %v751 = vmul.f32 %v643, %v643
      %v752 = vmul.f32 %v644, %v644
      %v753 = vmul.f32 %v645, %v645
      %v754 = vmul.f32 %v646, %v646
      %v755 = vmul.f32 %v647, %v647
      %v756 = vmul.f32 %v648, %v648
      %v757 = vmul.f32 %v649, %v649
      %v758 = vmul.f32 %v650, %v650
      %v759 = vmul.f32 %v651, %v651
      %v760 = vmul.f32 %v652, %v652
      %v761 = vmul.f32 %v653, %v653
      %v762 = vmul.f32 %v654, %v654
      %v763 = vmul.f32 %v655, %v655
      %v764 = vmul.f32 %v656, %v656
      %v765 = vmul.f32 %v657, %v657
      %v766 = vmul.f32 %v658, %v658
      %v767 = vmul.f32 %v659, %v659
      %v768 = vmul.f32 %v660, %v660
      %v769 = vmul.f32 %v661, %v661
      %v770 = vmul.f32 %v662, %v662
      %v771 = vmul.f32 %v663, %v663
      %v772 = vmul.f32 %v664, %v664
      %v773 = vmul.f32 %v665, %v665
      %v774 = vsel %vm287, %v667, 0.0
      %v775 = vadd.f32 %v666, %v774
      %776 = vadd.xlane.f32.xlu0 %v775
      %v777 = vpop.xlane.xlu0 %776
      %v778 = vsel %vm287, %v669, 0.0
      %v779 = vadd.f32 %v668, %v778
      %780 = vadd.xlane.f32.xlu0 %v779
      %v781 = vpop.xlane.xlu0 %780
      %v782 = vsel %vm287, %v671, 0.0
      %v783 = vadd.f32 %v670, %v782
      %784 = vadd.xlane.f32.xlu0 %v783
      %v785 = vpop.xlane.xlu0 %784
      %v786 = vsel %vm287, %v673, 0.0
      %v787 = vadd.f32 %v672, %v786
      %788 = vadd.xlane.f32.xlu0 %v787
      %v789 = vpop.xlane.xlu0 %788
      %v790 = vsel %vm287, %v675, 0.0
      %v791 = vadd.f32 %v674, %v790
      %792 = vadd.xlane.f32.xlu0 %v791
      %v793 = vpop.xlane.xlu0 %792
      %v794 = vsel %vm287, %v677, 0.0
      %v795 = vadd.f32 %v676, %v794
      %796 = vadd.xlane.f32.xlu0 %v795
      %v797 = vpop.xlane.xlu0 %796
      %v798 = vsel %vm287, %v679, 0.0
      %v799 = vadd.f32 %v678, %v798
      %800 = vadd.xlane.f32.xlu0 %v799
      %v801 = vpop.xlane.xlu0 %800
      %v802 = vsel %vm287, %v681, 0.0
      %v803 = vadd.f32 %v680, %v802
      %804 = vadd.xlane.f32.xlu0 %v803
      %v805 = vpop.xlane.xlu0 %804
      %v806 = vsel %vm287, %v683, 0.0
      %v807 = vadd.f32 %v682, %v806
      %808 = vadd.xlane.f32.xlu0 %v807
      %v809 = vpop.xlane.xlu0 %808
      %v810 = vsel %vm287, %v685, 0.0
      %v811 = vadd.f32 %v684, %v810
      %812 = vadd.xlane.f32.xlu0 %v811
      %v813 = vpop.xlane.xlu0 %812
      %v814 = vsel %vm287, %v687, 0.0
      %v815 = vadd.f32 %v686, %v814
      %816 = vadd.xlane.f32.xlu0 %v815
      %v817 = vpop.xlane.xlu0 %816
      %v818 = vsel %vm287, %v689, 0.0
      %v819 = vadd.f32 %v688, %v818
      %820 = vadd.xlane.f32.xlu0 %v819
      %v821 = vpop.xlane.xlu0 %820
      %v822 = vsel %vm287, %v691, 0.0
      %v823 = vadd.f32 %v690, %v822
      %824 = vadd.xlane.f32.xlu0 %v823
      %v825 = vpop.xlane.xlu0 %824
      %v826 = vsel %vm287, %v693, 0.0
      %v827 = vadd.f32 %v692, %v826
      %828 = vadd.xlane.f32.xlu0 %v827
      %v829 = vpop.xlane.xlu0 %828
      %v830 = vsel %vm287, %v695, 0.0
      %v831 = vadd.f32 %v694, %v830
      %832 = vadd.xlane.f32.xlu0 %v831
      %v833 = vpop.xlane.xlu0 %832
      %v834 = vsel %vm287, %v697, 0.0
      %v835 = vadd.f32 %v696, %v834
      %836 = vadd.xlane.f32.xlu0 %v835
      %v837 = vpop.xlane.xlu0 %836
      %v838 = vsel %vm287, %v699, 0.0
      %v839 = vadd.f32 %v698, %v838
      %840 = vadd.xlane.f32.xlu0 %v839
      %v841 = vpop.xlane.xlu0 %840
      %v842 = vsel %vm287, %v701, 0.0
      %v843 = vadd.f32 %v700, %v842
      %844 = vadd.xlane.f32.xlu0 %v843
      %v845 = vpop.xlane.xlu0 %844
      %v846 = vsel %vm287, %v703, 0.0
      %v847 = vadd.f32 %v702, %v846
      %848 = vadd.xlane.f32.xlu0 %v847
      %v849 = vpop.xlane.xlu0 %848
      %v850 = vsel %vm287, %v705, 0.0
      %v851 = vadd.f32 %v704, %v850
      %852 = vadd.xlane.f32.xlu0 %v851
      %v853 = vpop.xlane.xlu0 %852
      %v854 = vsel %vm287, %v707, 0.0
      %v855 = vadd.f32 %v706, %v854
      %856 = vadd.xlane.f32.xlu0 %v855
      %v857 = vpop.xlane.xlu0 %856
      %v858 = vsel %vm287, %v709, 0.0
      %v859 = vadd.f32 %v708, %v858
      %860 = vadd.xlane.f32.xlu0 %v859
      %v861 = vpop.xlane.xlu0 %860
      %v862 = vsel %vm287, %v711, 0.0
      %v863 = vadd.f32 %v710, %v862
      %864 = vadd.xlane.f32.xlu0 %v863
      %v865 = vpop.xlane.xlu0 %864
      %v866 = vsel %vm287, %v713, 0.0
      %v867 = vadd.f32 %v712, %v866
      %868 = vadd.xlane.f32.xlu0 %v867
      %v869 = vpop.xlane.xlu0 %868
      %v870 = vsel %vm287, %v715, 0.0
      %v871 = vadd.f32 %v714, %v870
      %872 = vadd.xlane.f32.xlu0 %v871
      %v873 = vpop.xlane.xlu0 %872
      %v874 = vsel %vm287, %v717, 0.0
      %v875 = vadd.f32 %v716, %v874
      %876 = vadd.xlane.f32.xlu0 %v875
      %v877 = vpop.xlane.xlu0 %876
      %v878 = vsel %vm287, %v719, 0.0
      %v879 = vadd.f32 %v718, %v878
      %880 = vadd.xlane.f32.xlu0 %v879
      %v881 = vpop.xlane.xlu0 %880
      %v882 = vsel %vm287, %v721, 0.0
      %v883 = vadd.f32 %v720, %v882
      %884 = vadd.xlane.f32.xlu0 %v883
      %v885 = vpop.xlane.xlu0 %884
      %v886 = vsel %vm287, %v723, 0.0
      %v887 = vadd.f32 %v722, %v886
      %888 = vadd.xlane.f32.xlu0 %v887
      %v889 = vpop.xlane.xlu0 %888
      %v890 = vsel %vm287, %v725, 0.0
      %v891 = vadd.f32 %v724, %v890
      %892 = vadd.xlane.f32.xlu0 %v891
      %v893 = vpop.xlane.xlu0 %892
      %v894 = vsel %vm287, %v727, 0.0
      %v895 = vadd.f32 %v726, %v894
      %896 = vadd.xlane.f32.xlu0 %v895
      %v897 = vpop.xlane.xlu0 %896
      %v898 = vsel %vm287, %v729, 0.0
      %v899 = vadd.f32 %v728, %v898
      %900 = vadd.xlane.f32.xlu0 %v899
      %v901 = vpop.xlane.xlu0 %900
      %v902 = vsel %vm287, %v731, 0.0
      %v903 = vadd.f32 %v730, %v902
      %904 = vadd.xlane.f32.xlu0 %v903
      %v905 = vpop.xlane.xlu0 %904
      %v906 = vsel %vm287, %v733, 0.0
      %v907 = vadd.f32 %v732, %v906
      %908 = vadd.xlane.f32.xlu0 %v907
      %v909 = vpop.xlane.xlu0 %908
      %v910 = vsel %vm287, %v735, 0.0
      %v911 = vadd.f32 %v734, %v910
      %912 = vadd.xlane.f32.xlu0 %v911
      %v913 = vpop.xlane.xlu0 %912
      %v914 = vsel %vm287, %v737, 0.0
      %v915 = vadd.f32 %v736, %v914
      %916 = vadd.xlane.f32.xlu0 %v915
      %v917 = vpop.xlane.xlu0 %916
      %v918 = vsel %vm287, %v739, 0.0
      %v919 = vadd.f32 %v738, %v918
      %920 = vadd.xlane.f32.xlu0 %v919
      %v921 = vpop.xlane.xlu0 %920
      %v922 = vsel %vm287, %v741, 0.0
      %v923 = vadd.f32 %v740, %v922
      %924 = vadd.xlane.f32.xlu0 %v923
      %v925 = vpop.xlane.xlu0 %924
      %v926 = vsel %vm287, %v743, 0.0
      %v927 = vadd.f32 %v742, %v926
      %928 = vadd.xlane.f32.xlu0 %v927
      %v929 = vpop.xlane.xlu0 %928
      %v930 = vsel %vm287, %v745, 0.0
      %v931 = vadd.f32 %v744, %v930
      %932 = vadd.xlane.f32.xlu0 %v931
      %v933 = vpop.xlane.xlu0 %932
      %v934 = vsel %vm287, %v747, 0.0
      %v935 = vadd.f32 %v746, %v934
      %936 = vadd.xlane.f32.xlu0 %v935
      %v937 = vpop.xlane.xlu0 %936
      %v938 = vsel %vm287, %v749, 0.0
      %v939 = vadd.f32 %v748, %v938
      %940 = vadd.xlane.f32.xlu0 %v939
      %v941 = vpop.xlane.xlu0 %940
      %v942 = vsel %vm287, %v751, 0.0
      %v943 = vadd.f32 %v750, %v942
      %944 = vadd.xlane.f32.xlu0 %v943
      %v945 = vpop.xlane.xlu0 %944
      %v946 = vsel %vm287, %v753, 0.0
      %v947 = vadd.f32 %v752, %v946
      %948 = vadd.xlane.f32.xlu0 %v947
      %v949 = vpop.xlane.xlu0 %948
      %v950 = vsel %vm287, %v755, 0.0
      %v951 = vadd.f32 %v754, %v950
      %952 = vadd.xlane.f32.xlu0 %v951
      %v953 = vpop.xlane.xlu0 %952
      %v954 = vsel %vm287, %v757, 0.0
      %v955 = vadd.f32 %v756, %v954
      %956 = vadd.xlane.f32.xlu0 %v955
      %v957 = vpop.xlane.xlu0 %956
      %v958 = vsel %vm287, %v759, 0.0
      %v959 = vadd.f32 %v758, %v958
      %960 = vadd.xlane.f32.xlu0 %v959
      %v961 = vpop.xlane.xlu0 %960
      %v962 = vsel %vm287, %v761, 0.0
      %v963 = vadd.f32 %v760, %v962
      %964 = vadd.xlane.f32.xlu0 %v963
      %v965 = vpop.xlane.xlu0 %964
      %v966 = vsel %vm287, %v763, 0.0
      %v967 = vadd.f32 %v762, %v966
      %968 = vadd.xlane.f32.xlu0 %v967
      %v969 = vpop.xlane.xlu0 %968
      %v970 = vsel %vm287, %v765, 0.0
      %v971 = vadd.f32 %v764, %v970
      %972 = vadd.xlane.f32.xlu0 %v971
      %v973 = vpop.xlane.xlu0 %972
      %v974 = vsel %vm287, %v767, 0.0
      %v975 = vadd.f32 %v766, %v974
      %976 = vadd.xlane.f32.xlu0 %v975
      %v977 = vpop.xlane.xlu0 %976
      %v978 = vsel %vm287, %v769, 0.0
      %v979 = vadd.f32 %v768, %v978
      %980 = vadd.xlane.f32.xlu0 %v979
      %v981 = vpop.xlane.xlu0 %980
      %v982 = vsel %vm287, %v771, 0.0
      %v983 = vadd.f32 %v770, %v982
      %984 = vadd.xlane.f32.xlu0 %v983
      %v985 = vpop.xlane.xlu0 %984
      %v986 = vsel %vm287, %v773, 0.0
      %v987 = vadd.f32 %v772, %v986
      %988 = vadd.xlane.f32.xlu0 %v987
      %v989 = vpop.xlane.xlu0 %988
      %v990 = vmul.f32 %v777, 0.0051020407
      %v991 = vmul.f32 %v781, 0.0051020407
      %v992 = vmul.f32 %v785, 0.0051020407
      %v993 = vmul.f32 %v789, 0.0051020407
      %v994 = vmul.f32 %v793, 0.0051020407
      %v995 = vmul.f32 %v797, 0.0051020407
      %v996 = vmul.f32 %v801, 0.0051020407
      %v997 = vmul.f32 %v805, 0.0051020407
      %v998 = vmul.f32 %v809, 0.0051020407
      %v999 = vmul.f32 %v813, 0.0051020407
      %v1000 = vmul.f32 %v817, 0.0051020407
      %v1001 = vmul.f32 %v821, 0.0051020407
      %v1002 = vmul.f32 %v825, 0.0051020407
      %v1003 = vmul.f32 %v829, 0.0051020407
      %v1004 = vmul.f32 %v833, 0.0051020407
      %v1005 = vmul.f32 %v837, 0.0051020407
      %v1006 = vmul.f32 %v841, 0.0051020407
      %v1007 = vmul.f32 %v845, 0.0051020407
      %v1008 = vmul.f32 %v849, 0.0051020407
      %v1009 = vmul.f32 %v853, 0.0051020407
      %v1010 = vmul.f32 %v857, 0.0051020407
      %v1011 = vmul.f32 %v861, 0.0051020407
      %v1012 = vmul.f32 %v865, 0.0051020407
      %v1013 = vmul.f32 %v869, 0.0051020407
      %v1014 = vmul.f32 %v873, 0.0051020407
      %v1015 = vmul.f32 %v877, 0.0051020407
      %v1016 = vmul.f32 %v881, 0.0051020407
      %v1017 = vmul.f32 %v885, 0.0051020407
      %v1018 = vmul.f32 %v889, 0.0051020407
      %v1019 = vmul.f32 %v893, 0.0051020407
      %v1020 = vmul.f32 %v897, 0.0051020407
      %v1021 = vmul.f32 %v901, 0.0051020407
      %v1022 = vmul.f32 %v905, 0.0051020407
      %v1023 = vmul.f32 %v909, 0.0051020407
      %v1024 = vmul.f32 %v913, 0.0051020407
      %v1025 = vmul.f32 %v917, 0.0051020407
      %v1026 = vmul.f32 %v921, 0.0051020407
      %v1027 = vmul.f32 %v925, 0.0051020407
      %v1028 = vmul.f32 %v929, 0.0051020407
      %v1029 = vmul.f32 %v933, 0.0051020407
      %v1030 = vmul.f32 %v937, 0.0051020407
      %v1031 = vmul.f32 %v941, 0.0051020407
      %v1032 = vmul.f32 %v945, 0.0051020407
      %v1033 = vmul.f32 %v949, 0.0051020407
      %v1034 = vmul.f32 %v953, 0.0051020407
      %v1035 = vmul.f32 %v957, 0.0051020407
      %v1036 = vmul.f32 %v961, 0.0051020407
      %v1037 = vmul.f32 %v965, 0.0051020407
      %v1038 = vmul.f32 %v969, 0.0051020407
      %v1039 = vmul.f32 %v973, 0.0051020407
      %v1040 = vmul.f32 %v977, 0.0051020407
      %v1041 = vmul.f32 %v981, 0.0051020407
      %v1042 = vmul.f32 %v985, 0.0051020407
      %v1043 = vmul.f32 %v989, 0.0051020407
      %v1044 = vadd.f32 %v990, 1e-05
      %v1045 = vadd.f32 %v991, 1e-05
      %v1046 = vadd.f32 %v992, 1e-05
      %v1047 = vadd.f32 %v993, 1e-05
      %v1048 = vadd.f32 %v994, 1e-05
      %v1049 = vadd.f32 %v995, 1e-05
      %v1050 = vadd.f32 %v996, 1e-05
      %v1051 = vadd.f32 %v997, 1e-05
      %v1052 = vadd.f32 %v998, 1e-05
      %v1053 = vadd.f32 %v999, 1e-05
      %v1054 = vadd.f32 %v1000, 1e-05
      %v1055 = vadd.f32 %v1001, 1e-05
      %v1056 = vadd.f32 %v1002, 1e-05
      %v1057 = vadd.f32 %v1003, 1e-05
      %v1058 = vadd.f32 %v1004, 1e-05
      %v1059 = vadd.f32 %v1005, 1e-05
      %v1060 = vadd.f32 %v1006, 1e-05
      %v1061 = vadd.f32 %v1007, 1e-05
      %v1062 = vadd.f32 %v1008, 1e-05
      %v1063 = vadd.f32 %v1009, 1e-05
      %v1064 = vadd.f32 %v1010, 1e-05
      %v1065 = vadd.f32 %v1011, 1e-05
      %v1066 = vadd.f32 %v1012, 1e-05
      %v1067 = vadd.f32 %v1013, 1e-05
      %v1068 = vadd.f32 %v1014, 1e-05
      %v1069 = vadd.f32 %v1015, 1e-05
      %v1070 = vadd.f32 %v1016, 1e-05
      %v1071 = vadd.f32 %v1017, 1e-05
      %v1072 = vadd.f32 %v1018, 1e-05
      %v1073 = vadd.f32 %v1019, 1e-05
      %v1074 = vadd.f32 %v1020, 1e-05
      %v1075 = vadd.f32 %v1021, 1e-05
      %v1076 = vadd.f32 %v1022, 1e-05
      %v1077 = vadd.f32 %v1023, 1e-05
      %v1078 = vadd.f32 %v1024, 1e-05
      %v1079 = vadd.f32 %v1025, 1e-05
      %v1080 = vadd.f32 %v1026, 1e-05
      %v1081 = vadd.f32 %v1027, 1e-05
      %v1082 = vadd.f32 %v1028, 1e-05
      %v1083 = vadd.f32 %v1029, 1e-05
      %v1084 = vadd.f32 %v1030, 1e-05
      %v1085 = vadd.f32 %v1031, 1e-05
      %v1086 = vadd.f32 %v1032, 1e-05
      %v1087 = vadd.f32 %v1033, 1e-05
      %v1088 = vadd.f32 %v1034, 1e-05
      %v1089 = vadd.f32 %v1035, 1e-05
      %v1090 = vadd.f32 %v1036, 1e-05
      %v1091 = vadd.f32 %v1037, 1e-05
      %v1092 = vadd.f32 %v1038, 1e-05
      %v1093 = vadd.f32 %v1039, 1e-05
      %v1094 = vadd.f32 %v1040, 1e-05
      %v1095 = vadd.f32 %v1041, 1e-05
      %v1096 = vadd.f32 %v1042, 1e-05
      %v1097 = vadd.f32 %v1043, 1e-05
      %v1098 = vrsqrt.pop %v1044
      %v1099 = vmul.f32 %v1098, %v1044
      %v1100 = vmul.f32 %v1099, %v1098
      %v1101 = vmul.f32 0.5, %v1100
      %v1102 = vsub.f32 1.5, %v1101
      %v1103 = vmul.f32 %v1098, %v1102
      %vm1104 = vweird.f32 %v1044
      %vm1105 = vweird.f32 %v1098
      %vm1106 = vmor %vm1104, %vm1105
      %v1107 = vsel %vm1106, %v1098, %v1103
      %v1108 = vrsqrt.pop %v1045
      %v1109 = vmul.f32 %v1108, %v1045
      %v1110 = vmul.f32 %v1109, %v1108
      %v1111 = vmul.f32 0.5, %v1110
      %v1112 = vsub.f32 1.5, %v1111
      %v1113 = vmul.f32 %v1108, %v1112
      %vm1114 = vweird.f32 %v1045
      %vm1115 = vweird.f32 %v1108
      %vm1116 = vmor %vm1114, %vm1115
      %v1117 = vsel %vm1116, %v1108, %v1113
      %v1118 = vrsqrt.pop %v1046
      %v1119 = vmul.f32 %v1118, %v1046
      %v1120 = vmul.f32 %v1119, %v1118
      %v1121 = vmul.f32 0.5, %v1120
      %v1122 = vsub.f32 1.5, %v1121
      %v1123 = vmul.f32 %v1118, %v1122
      %vm1124 = vweird.f32 %v1046
      %vm1125 = vweird.f32 %v1118
      %vm1126 = vmor %vm1124, %vm1125
      %v1127 = vsel %vm1126, %v1118, %v1123
      %v1128 = vrsqrt.pop %v1047
      %v1129 = vmul.f32 %v1128, %v1047
      %v1130 = vmul.f32 %v1129, %v1128
      %v1131 = vmul.f32 0.5, %v1130
      %v1132 = vsub.f32 1.5, %v1131
      %v1133 = vmul.f32 %v1128, %v1132
      %vm1134 = vweird.f32 %v1047
      %vm1135 = vweird.f32 %v1128
      %vm1136 = vmor %vm1134, %vm1135
      %v1137 = vsel %vm1136, %v1128, %v1133
      %v1138 = vrsqrt.pop %v1048
      %v1139 = vmul.f32 %v1138, %v1048
      %v1140 = vmul.f32 %v1139, %v1138
      %v1141 = vmul.f32 0.5, %v1140
      %v1142 = vsub.f32 1.5, %v1141
      %v1143 = vmul.f32 %v1138, %v1142
      %vm1144 = vweird.f32 %v1048
      %vm1145 = vweird.f32 %v1138
      %vm1146 = vmor %vm1144, %vm1145
      %v1147 = vsel %vm1146, %v1138, %v1143
      %v1148 = vrsqrt.pop %v1049
      %v1149 = vmul.f32 %v1148, %v1049
      %v1150 = vmul.f32 %v1149, %v1148
      %v1151 = vmul.f32 0.5, %v1150
      %v1152 = vsub.f32 1.5, %v1151
      %v1153 = vmul.f32 %v1148, %v1152
      %vm1154 = vweird.f32 %v1049
      %vm1155 = vweird.f32 %v1148
      %vm1156 = vmor %vm1154, %vm1155
      %v1157 = vsel %vm1156, %v1148, %v1153
      %v1158 = vrsqrt.pop %v1050
      %v1159 = vmul.f32 %v1158, %v1050
      %v1160 = vmul.f32 %v1159, %v1158
      %v1161 = vmul.f32 0.5, %v1160
      %v1162 = vsub.f32 1.5, %v1161
      %v1163 = vmul.f32 %v1158, %v1162
      %vm1164 = vweird.f32 %v1050
      %vm1165 = vweird.f32 %v1158
      %vm1166 = vmor %vm1164, %vm1165
      %v1167 = vsel %vm1166, %v1158, %v1163
      %v1168 = vrsqrt.pop %v1051
      %v1169 = vmul.f32 %v1168, %v1051
      %v1170 = vmul.f32 %v1169, %v1168
      %v1171 = vmul.f32 0.5, %v1170
      %v1172 = vsub.f32 1.5, %v1171
      %v1173 = vmul.f32 %v1168, %v1172
      %vm1174 = vweird.f32 %v1051
      %vm1175 = vweird.f32 %v1168
      %vm1176 = vmor %vm1174, %vm1175
      %v1177 = vsel %vm1176, %v1168, %v1173
      %v1178 = vrsqrt.pop %v1052
      %v1179 = vmul.f32 %v1178, %v1052
      %v1180 = vmul.f32 %v1179, %v1178
      %v1181 = vmul.f32 0.5, %v1180
      %v1182 = vsub.f32 1.5, %v1181
      %v1183 = vmul.f32 %v1178, %v1182
      %vm1184 = vweird.f32 %v1052
      %vm1185 = vweird.f32 %v1178
      %vm1186 = vmor %vm1184, %vm1185
      %v1187 = vsel %vm1186, %v1178, %v1183
      %v1188 = vrsqrt.pop %v1053
      %v1189 = vmul.f32 %v1188, %v1053
      %v1190 = vmul.f32 %v1189, %v1188
      %v1191 = vmul.f32 0.5, %v1190
      %v1192 = vsub.f32 1.5, %v1191
      %v1193 = vmul.f32 %v1188, %v1192
      %vm1194 = vweird.f32 %v1053
      %vm1195 = vweird.f32 %v1188
      %vm1196 = vmor %vm1194, %vm1195
      %v1197 = vsel %vm1196, %v1188, %v1193
      %v1198 = vrsqrt.pop %v1054
      %v1199 = vmul.f32 %v1198, %v1054
      %v1200 = vmul.f32 %v1199, %v1198
      %v1201 = vmul.f32 0.5, %v1200
      %v1202 = vsub.f32 1.5, %v1201
      %v1203 = vmul.f32 %v1198, %v1202
      %vm1204 = vweird.f32 %v1054
      %vm1205 = vweird.f32 %v1198
      %vm1206 = vmor %vm1204, %vm1205
      %v1207 = vsel %vm1206, %v1198, %v1203
      %v1208 = vrsqrt.pop %v1055
      %v1209 = vmul.f32 %v1208, %v1055
      %v1210 = vmul.f32 %v1209, %v1208
      %v1211 = vmul.f32 0.5, %v1210
      %v1212 = vsub.f32 1.5, %v1211
      %v1213 = vmul.f32 %v1208, %v1212
      %vm1214 = vweird.f32 %v1055
      %vm1215 = vweird.f32 %v1208
      %vm1216 = vmor %vm1214, %vm1215
      %v1217 = vsel %vm1216, %v1208, %v1213
      %v1218 = vrsqrt.pop %v1056
      %v1219 = vmul.f32 %v1218, %v1056
      %v1220 = vmul.f32 %v1219, %v1218
      %v1221 = vmul.f32 0.5, %v1220
      %v1222 = vsub.f32 1.5, %v1221
      %v1223 = vmul.f32 %v1218, %v1222
      %vm1224 = vweird.f32 %v1056
      %vm1225 = vweird.f32 %v1218
      %vm1226 = vmor %vm1224, %vm1225
      %v1227 = vsel %vm1226, %v1218, %v1223
      %v1228 = vrsqrt.pop %v1057
      %v1229 = vmul.f32 %v1228, %v1057
      %v1230 = vmul.f32 %v1229, %v1228
      %v1231 = vmul.f32 0.5, %v1230
      %v1232 = vsub.f32 1.5, %v1231
      %v1233 = vmul.f32 %v1228, %v1232
      %vm1234 = vweird.f32 %v1057
      %vm1235 = vweird.f32 %v1228
      %vm1236 = vmor %vm1234, %vm1235
      %v1237 = vsel %vm1236, %v1228, %v1233
      %v1238 = vrsqrt.pop %v1058
      %v1239 = vmul.f32 %v1238, %v1058
      %v1240 = vmul.f32 %v1239, %v1238
      %v1241 = vmul.f32 0.5, %v1240
      %v1242 = vsub.f32 1.5, %v1241
      %v1243 = vmul.f32 %v1238, %v1242
      %vm1244 = vweird.f32 %v1058
      %vm1245 = vweird.f32 %v1238
      %vm1246 = vmor %vm1244, %vm1245
      %v1247 = vsel %vm1246, %v1238, %v1243
      %v1248 = vrsqrt.pop %v1059
      %v1249 = vmul.f32 %v1248, %v1059
      %v1250 = vmul.f32 %v1249, %v1248
      %v1251 = vmul.f32 0.5, %v1250
      %v1252 = vsub.f32 1.5, %v1251
      %v1253 = vmul.f32 %v1248, %v1252
      %vm1254 = vweird.f32 %v1059
      %vm1255 = vweird.f32 %v1248
      %vm1256 = vmor %vm1254, %vm1255
      %v1257 = vsel %vm1256, %v1248, %v1253
      %v1258 = vrsqrt.pop %v1060
      %v1259 = vmul.f32 %v1258, %v1060
      %v1260 = vmul.f32 %v1259, %v1258
      %v1261 = vmul.f32 0.5, %v1260
      %v1262 = vsub.f32 1.5, %v1261
      %v1263 = vmul.f32 %v1258, %v1262
      %vm1264 = vweird.f32 %v1060
      %vm1265 = vweird.f32 %v1258
      %vm1266 = vmor %vm1264, %vm1265
      %v1267 = vsel %vm1266, %v1258, %v1263
      %v1268 = vrsqrt.pop %v1061
      %v1269 = vmul.f32 %v1268, %v1061
      %v1270 = vmul.f32 %v1269, %v1268
      %v1271 = vmul.f32 0.5, %v1270
      %v1272 = vsub.f32 1.5, %v1271
      %v1273 = vmul.f32 %v1268, %v1272
      %vm1274 = vweird.f32 %v1061
      %vm1275 = vweird.f32 %v1268
      %vm1276 = vmor %vm1274, %vm1275
      %v1277 = vsel %vm1276, %v1268, %v1273
      %v1278 = vrsqrt.pop %v1062
      %v1279 = vmul.f32 %v1278, %v1062
      %v1280 = vmul.f32 %v1279, %v1278
      %v1281 = vmul.f32 0.5, %v1280
      %v1282 = vsub.f32 1.5, %v1281
      %v1283 = vmul.f32 %v1278, %v1282
      %vm1284 = vweird.f32 %v1062
      %vm1285 = vweird.f32 %v1278
      %vm1286 = vmor %vm1284, %vm1285
      %v1287 = vsel %vm1286, %v1278, %v1283
      %v1288 = vrsqrt.pop %v1063
      %v1289 = vmul.f32 %v1288, %v1063
      %v1290 = vmul.f32 %v1289, %v1288
      %v1291 = vmul.f32 0.5, %v1290
      %v1292 = vsub.f32 1.5, %v1291
      %v1293 = vmul.f32 %v1288, %v1292
      %vm1294 = vweird.f32 %v1063
      %vm1295 = vweird.f32 %v1288
      %vm1296 = vmor %vm1294, %vm1295
      %v1297 = vsel %vm1296, %v1288, %v1293
      %v1298 = vrsqrt.pop %v1064
      %v1299 = vmul.f32 %v1298, %v1064
      %v1300 = vmul.f32 %v1299, %v1298
      %v1301 = vmul.f32 0.5, %v1300
      %v1302 = vsub.f32 1.5, %v1301
      %v1303 = vmul.f32 %v1298, %v1302
      %vm1304 = vweird.f32 %v1064
      %vm1305 = vweird.f32 %v1298
      %vm1306 = vmor %vm1304, %vm1305
      %v1307 = vsel %vm1306, %v1298, %v1303
      %v1308 = vrsqrt.pop %v1065
      %v1309 = vmul.f32 %v1308, %v1065
      %v1310 = vmul.f32 %v1309, %v1308
      %v1311 = vmul.f32 0.5, %v1310
      %v1312 = vsub.f32 1.5, %v1311
      %v1313 = vmul.f32 %v1308, %v1312
      %vm1314 = vweird.f32 %v1065
      %vm1315 = vweird.f32 %v1308
      %vm1316 = vmor %vm1314, %vm1315
      %v1317 = vsel %vm1316, %v1308, %v1313
      %v1318 = vrsqrt.pop %v1066
      %v1319 = vmul.f32 %v1318, %v1066
      %v1320 = vmul.f32 %v1319, %v1318
      %v1321 = vmul.f32 0.5, %v1320
      %v1322 = vsub.f32 1.5, %v1321
      %v1323 = vmul.f32 %v1318, %v1322
      %vm1324 = vweird.f32 %v1066
      %vm1325 = vweird.f32 %v1318
      %vm1326 = vmor %vm1324, %vm1325
      %v1327 = vsel %vm1326, %v1318, %v1323
      %v1328 = vrsqrt.pop %v1067
      %v1329 = vmul.f32 %v1328, %v1067
      %v1330 = vmul.f32 %v1329, %v1328
      %v1331 = vmul.f32 0.5, %v1330
      %v1332 = vsub.f32 1.5, %v1331
      %v1333 = vmul.f32 %v1328, %v1332
      %vm1334 = vweird.f32 %v1067
      %vm1335 = vweird.f32 %v1328
      %vm1336 = vmor %vm1334, %vm1335
      %v1337 = vsel %vm1336, %v1328, %v1333
      %v1338 = vrsqrt.pop %v1068
      %v1339 = vmul.f32 %v1338, %v1068
      %v1340 = vmul.f32 %v1339, %v1338
      %v1341 = vmul.f32 0.5, %v1340
      %v1342 = vsub.f32 1.5, %v1341
      %v1343 = vmul.f32 %v1338, %v1342
      %vm1344 = vweird.f32 %v1068
      %vm1345 = vweird.f32 %v1338
      %vm1346 = vmor %vm1344, %vm1345
      %v1347 = vsel %vm1346, %v1338, %v1343
      %v1348 = vrsqrt.pop %v1069
      %v1349 = vmul.f32 %v1348, %v1069
      %v1350 = vmul.f32 %v1349, %v1348
      %v1351 = vmul.f32 0.5, %v1350
      %v1352 = vsub.f32 1.5, %v1351
      %v1353 = vmul.f32 %v1348, %v1352
      %vm1354 = vweird.f32 %v1069
      %vm1355 = vweird.f32 %v1348
      %vm1356 = vmor %vm1354, %vm1355
      %v1357 = vsel %vm1356, %v1348, %v1353
      %v1358 = vrsqrt.pop %v1070
      %v1359 = vmul.f32 %v1358, %v1070
      %v1360 = vmul.f32 %v1359, %v1358
      %v1361 = vmul.f32 0.5, %v1360
      %v1362 = vsub.f32 1.5, %v1361
      %v1363 = vmul.f32 %v1358, %v1362
      %vm1364 = vweird.f32 %v1070
      %vm1365 = vweird.f32 %v1358
      %vm1366 = vmor %vm1364, %vm1365
      %v1367 = vsel %vm1366, %v1358, %v1363
      %v1368 = vrsqrt.pop %v1071
      %v1369 = vmul.f32 %v1368, %v1071
      %v1370 = vmul.f32 %v1369, %v1368
      %v1371 = vmul.f32 0.5, %v1370
      %v1372 = vsub.f32 1.5, %v1371
      %v1373 = vmul.f32 %v1368, %v1372
      %vm1374 = vweird.f32 %v1071
      %vm1375 = vweird.f32 %v1368
      %vm1376 = vmor %vm1374, %vm1375
      %v1377 = vsel %vm1376, %v1368, %v1373
      %v1378 = vrsqrt.pop %v1072
      %v1379 = vmul.f32 %v1378, %v1072
      %v1380 = vmul.f32 %v1379, %v1378
      %v1381 = vmul.f32 0.5, %v1380
      %v1382 = vsub.f32 1.5, %v1381
      %v1383 = vmul.f32 %v1378, %v1382
      %vm1384 = vweird.f32 %v1072
      %vm1385 = vweird.f32 %v1378
      %vm1386 = vmor %vm1384, %vm1385
      %v1387 = vsel %vm1386, %v1378, %v1383
      %v1388 = vrsqrt.pop %v1073
      %v1389 = vmul.f32 %v1388, %v1073
      %v1390 = vmul.f32 %v1389, %v1388
      %v1391 = vmul.f32 0.5, %v1390
      %v1392 = vsub.f32 1.5, %v1391
      %v1393 = vmul.f32 %v1388, %v1392
      %vm1394 = vweird.f32 %v1073
      %vm1395 = vweird.f32 %v1388
      %vm1396 = vmor %vm1394, %vm1395
      %v1397 = vsel %vm1396, %v1388, %v1393
      %v1398 = vrsqrt.pop %v1074
      %v1399 = vmul.f32 %v1398, %v1074
      %v1400 = vmul.f32 %v1399, %v1398
      %v1401 = vmul.f32 0.5, %v1400
      %v1402 = vsub.f32 1.5, %v1401
      %v1403 = vmul.f32 %v1398, %v1402
      %vm1404 = vweird.f32 %v1074
      %vm1405 = vweird.f32 %v1398
      %vm1406 = vmor %vm1404, %vm1405
      %v1407 = vsel %vm1406, %v1398, %v1403
      %v1408 = vrsqrt.pop %v1075
      %v1409 = vmul.f32 %v1408, %v1075
      %v1410 = vmul.f32 %v1409, %v1408
      %v1411 = vmul.f32 0.5, %v1410
      %v1412 = vsub.f32 1.5, %v1411
      %v1413 = vmul.f32 %v1408, %v1412
      %vm1414 = vweird.f32 %v1075
      %vm1415 = vweird.f32 %v1408
      %vm1416 = vmor %vm1414, %vm1415
      %v1417 = vsel %vm1416, %v1408, %v1413
      %v1418 = vrsqrt.pop %v1076
      %v1419 = vmul.f32 %v1418, %v1076
      %v1420 = vmul.f32 %v1419, %v1418
      %v1421 = vmul.f32 0.5, %v1420
      %v1422 = vsub.f32 1.5, %v1421
      %v1423 = vmul.f32 %v1418, %v1422
      %vm1424 = vweird.f32 %v1076
      %vm1425 = vweird.f32 %v1418
      %vm1426 = vmor %vm1424, %vm1425
      %v1427 = vsel %vm1426, %v1418, %v1423
      %v1428 = vrsqrt.pop %v1077
      %v1429 = vmul.f32 %v1428, %v1077
      %v1430 = vmul.f32 %v1429, %v1428
      %v1431 = vmul.f32 0.5, %v1430
      %v1432 = vsub.f32 1.5, %v1431
      %v1433 = vmul.f32 %v1428, %v1432
      %vm1434 = vweird.f32 %v1077
      %vm1435 = vweird.f32 %v1428
      %vm1436 = vmor %vm1434, %vm1435
      %v1437 = vsel %vm1436, %v1428, %v1433
      %v1438 = vrsqrt.pop %v1078
      %v1439 = vmul.f32 %v1438, %v1078
      %v1440 = vmul.f32 %v1439, %v1438
      %v1441 = vmul.f32 0.5, %v1440
      %v1442 = vsub.f32 1.5, %v1441
      %v1443 = vmul.f32 %v1438, %v1442
      %vm1444 = vweird.f32 %v1078
      %vm1445 = vweird.f32 %v1438
      %vm1446 = vmor %vm1444, %vm1445
      %v1447 = vsel %vm1446, %v1438, %v1443
      %v1448 = vrsqrt.pop %v1079
      %v1449 = vmul.f32 %v1448, %v1079
      %v1450 = vmul.f32 %v1449, %v1448
      %v1451 = vmul.f32 0.5, %v1450
      %v1452 = vsub.f32 1.5, %v1451
      %v1453 = vmul.f32 %v1448, %v1452
      %vm1454 = vweird.f32 %v1079
      %vm1455 = vweird.f32 %v1448
      %vm1456 = vmor %vm1454, %vm1455
      %v1457 = vsel %vm1456, %v1448, %v1453
      %v1458 = vrsqrt.pop %v1080
      %v1459 = vmul.f32 %v1458, %v1080
      %v1460 = vmul.f32 %v1459, %v1458
      %v1461 = vmul.f32 0.5, %v1460
      %v1462 = vsub.f32 1.5, %v1461
      %v1463 = vmul.f32 %v1458, %v1462
      %vm1464 = vweird.f32 %v1080
      %vm1465 = vweird.f32 %v1458
      %vm1466 = vmor %vm1464, %vm1465
      %v1467 = vsel %vm1466, %v1458, %v1463
      %v1468 = vrsqrt.pop %v1081
      %v1469 = vmul.f32 %v1468, %v1081
      %v1470 = vmul.f32 %v1469, %v1468
      %v1471 = vmul.f32 0.5, %v1470
      %v1472 = vsub.f32 1.5, %v1471
      %v1473 = vmul.f32 %v1468, %v1472
      %vm1474 = vweird.f32 %v1081
      %vm1475 = vweird.f32 %v1468
      %vm1476 = vmor %vm1474, %vm1475
      %v1477 = vsel %vm1476, %v1468, %v1473
      %v1478 = vrsqrt.pop %v1082
      %v1479 = vmul.f32 %v1478, %v1082
      %v1480 = vmul.f32 %v1479, %v1478
      %v1481 = vmul.f32 0.5, %v1480
      %v1482 = vsub.f32 1.5, %v1481
      %v1483 = vmul.f32 %v1478, %v1482
      %vm1484 = vweird.f32 %v1082
      %vm1485 = vweird.f32 %v1478
      %vm1486 = vmor %vm1484, %vm1485
      %v1487 = vsel %vm1486, %v1478, %v1483
      %v1488 = vrsqrt.pop %v1083
      %v1489 = vmul.f32 %v1488, %v1083
      %v1490 = vmul.f32 %v1489, %v1488
      %v1491 = vmul.f32 0.5, %v1490
      %v1492 = vsub.f32 1.5, %v1491
      %v1493 = vmul.f32 %v1488, %v1492
      %vm1494 = vweird.f32 %v1083
      %vm1495 = vweird.f32 %v1488
      %vm1496 = vmor %vm1494, %vm1495
      %v1497 = vsel %vm1496, %v1488, %v1493
      %v1498 = vrsqrt.pop %v1084
      %v1499 = vmul.f32 %v1498, %v1084
      %v1500 = vmul.f32 %v1499, %v1498
      %v1501 = vmul.f32 0.5, %v1500
      %v1502 = vsub.f32 1.5, %v1501
      %v1503 = vmul.f32 %v1498, %v1502
      %vm1504 = vweird.f32 %v1084
      %vm1505 = vweird.f32 %v1498
      %vm1506 = vmor %vm1504, %vm1505
      %v1507 = vsel %vm1506, %v1498, %v1503
      %v1508 = vrsqrt.pop %v1085
      %v1509 = vmul.f32 %v1508, %v1085
      %v1510 = vmul.f32 %v1509, %v1508
      %v1511 = vmul.f32 0.5, %v1510
      %v1512 = vsub.f32 1.5, %v1511
      %v1513 = vmul.f32 %v1508, %v1512
      %vm1514 = vweird.f32 %v1085
      %vm1515 = vweird.f32 %v1508
      %vm1516 = vmor %vm1514, %vm1515
      %v1517 = vsel %vm1516, %v1508, %v1513
      %v1518 = vrsqrt.pop %v1086
      %v1519 = vmul.f32 %v1518, %v1086
      %v1520 = vmul.f32 %v1519, %v1518
      %v1521 = vmul.f32 0.5, %v1520
      %v1522 = vsub.f32 1.5, %v1521
      %v1523 = vmul.f32 %v1518, %v1522
      %vm1524 = vweird.f32 %v1086
      %vm1525 = vweird.f32 %v1518
      %vm1526 = vmor %vm1524, %vm1525
      %v1527 = vsel %vm1526, %v1518, %v1523
      %v1528 = vrsqrt.pop %v1087
      %v1529 = vmul.f32 %v1528, %v1087
      %v1530 = vmul.f32 %v1529, %v1528
      %v1531 = vmul.f32 0.5, %v1530
      %v1532 = vsub.f32 1.5, %v1531
      %v1533 = vmul.f32 %v1528, %v1532
      %vm1534 = vweird.f32 %v1087
      %vm1535 = vweird.f32 %v1528
      %vm1536 = vmor %vm1534, %vm1535
      %v1537 = vsel %vm1536, %v1528, %v1533
      %v1538 = vrsqrt.pop %v1088
      %v1539 = vmul.f32 %v1538, %v1088
      %v1540 = vmul.f32 %v1539, %v1538
      %v1541 = vmul.f32 0.5, %v1540
      %v1542 = vsub.f32 1.5, %v1541
      %v1543 = vmul.f32 %v1538, %v1542
      %vm1544 = vweird.f32 %v1088
      %vm1545 = vweird.f32 %v1538
      %vm1546 = vmor %vm1544, %vm1545
      %v1547 = vsel %vm1546, %v1538, %v1543
      %v1548 = vrsqrt.pop %v1089
      %v1549 = vmul.f32 %v1548, %v1089
      %v1550 = vmul.f32 %v1549, %v1548
      %v1551 = vmul.f32 0.5, %v1550
      %v1552 = vsub.f32 1.5, %v1551
      %v1553 = vmul.f32 %v1548, %v1552
      %vm1554 = vweird.f32 %v1089
      %vm1555 = vweird.f32 %v1548
      %vm1556 = vmor %vm1554, %vm1555
      %v1557 = vsel %vm1556, %v1548, %v1553
      %v1558 = vrsqrt.pop %v1090
      %v1559 = vmul.f32 %v1558, %v1090
      %v1560 = vmul.f32 %v1559, %v1558
      %v1561 = vmul.f32 0.5, %v1560
      %v1562 = vsub.f32 1.5, %v1561
      %v1563 = vmul.f32 %v1558, %v1562
      %vm1564 = vweird.f32 %v1090
      %vm1565 = vweird.f32 %v1558
      %vm1566 = vmor %vm1564, %vm1565
      %v1567 = vsel %vm1566, %v1558, %v1563
      %v1568 = vrsqrt.pop %v1091
      %v1569 = vmul.f32 %v1568, %v1091
      %v1570 = vmul.f32 %v1569, %v1568
      %v1571 = vmul.f32 0.5, %v1570
      %v1572 = vsub.f32 1.5, %v1571
      %v1573 = vmul.f32 %v1568, %v1572
      %vm1574 = vweird.f32 %v1091
      %vm1575 = vweird.f32 %v1568
      %vm1576 = vmor %vm1574, %vm1575
      %v1577 = vsel %vm1576, %v1568, %v1573
      %v1578 = vrsqrt.pop %v1092
      %v1579 = vmul.f32 %v1578, %v1092
      %v1580 = vmul.f32 %v1579, %v1578
      %v1581 = vmul.f32 0.5, %v1580
      %v1582 = vsub.f32 1.5, %v1581
      %v1583 = vmul.f32 %v1578, %v1582
      %vm1584 = vweird.f32 %v1092
      %vm1585 = vweird.f32 %v1578
      %vm1586 = vmor %vm1584, %vm1585
      %v1587 = vsel %vm1586, %v1578, %v1583
      %v1588 = vrsqrt.pop %v1093
      %v1589 = vmul.f32 %v1588, %v1093
      %v1590 = vmul.f32 %v1589, %v1588
      %v1591 = vmul.f32 0.5, %v1590
      %v1592 = vsub.f32 1.5, %v1591
      %v1593 = vmul.f32 %v1588, %v1592
      %vm1594 = vweird.f32 %v1093
      %vm1595 = vweird.f32 %v1588
      %vm1596 = vmor %vm1594, %vm1595
      %v1597 = vsel %vm1596, %v1588, %v1593
      %v1598 = vrsqrt.pop %v1094
      %v1599 = vmul.f32 %v1598, %v1094
      %v1600 = vmul.f32 %v1599, %v1598
      %v1601 = vmul.f32 0.5, %v1600
      %v1602 = vsub.f32 1.5, %v1601
      %v1603 = vmul.f32 %v1598, %v1602
      %vm1604 = vweird.f32 %v1094
      %vm1605 = vweird.f32 %v1598
      %vm1606 = vmor %vm1604, %vm1605
      %v1607 = vsel %vm1606, %v1598, %v1603
      %v1608 = vrsqrt.pop %v1095
      %v1609 = vmul.f32 %v1608, %v1095
      %v1610 = vmul.f32 %v1609, %v1608
      %v1611 = vmul.f32 0.5, %v1610
      %v1612 = vsub.f32 1.5, %v1611
      %v1613 = vmul.f32 %v1608, %v1612
      %vm1614 = vweird.f32 %v1095
      %vm1615 = vweird.f32 %v1608
      %vm1616 = vmor %vm1614, %vm1615
      %v1617 = vsel %vm1616, %v1608, %v1613
      %v1618 = vrsqrt.pop %v1096
      %v1619 = vmul.f32 %v1618, %v1096
      %v1620 = vmul.f32 %v1619, %v1618
      %v1621 = vmul.f32 0.5, %v1620
      %v1622 = vsub.f32 1.5, %v1621
      %v1623 = vmul.f32 %v1618, %v1622
      %vm1624 = vweird.f32 %v1096
      %vm1625 = vweird.f32 %v1618
      %vm1626 = vmor %vm1624, %vm1625
      %v1627 = vsel %vm1626, %v1618, %v1623
      %v1628 = vrsqrt.pop %v1097
      %v1629 = vmul.f32 %v1628, %v1097
      %v1630 = vmul.f32 %v1629, %v1628
      %v1631 = vmul.f32 0.5, %v1630
      %v1632 = vsub.f32 1.5, %v1631
      %v1633 = vmul.f32 %v1628, %v1632
      %vm1634 = vweird.f32 %v1097
      %vm1635 = vweird.f32 %v1628
      %vm1636 = vmor %vm1634, %vm1635
      %v1637 = vsel %vm1636, %v1628, %v1633
      %s1638 = smul.u32 %s14, 432
      %s1639 = scalar_lea.vmem %s1, %s1638
      %v1640 = vld [vmem:[%s1639] sm:$0xff]
      %v1641 = vld [vmem:[%s1639 + $0x8] sm:$0xff]
      %v1642 = vld [vmem:[%s1639 + $0x10] sm:$0xff]
      %v1643 = vld [vmem:[%s1639 + $0x18] sm:$0xff]
      %v1644 = vld [vmem:[%s1639 + $0x20] sm:$0xff]
      %v1645 = vld [vmem:[%s1639 + $0x28] sm:$0xff]
      %v1646 = vld [vmem:[%s1639 + $0x30] sm:$0xff]
      %v1647 = vld [vmem:[%s1639 + $0x38] sm:$0xff]
      %v1648 = vld [vmem:[%s1639 + $0x40] sm:$0xff]
      %v1649 = vld [vmem:[%s1639 + $0x48] sm:$0xff]
      %v1650 = vld [vmem:[%s1639 + $0x50] sm:$0xff]
      %v1651 = vld [vmem:[%s1639 + $0x58] sm:$0xff]
      %v1652 = vld [vmem:[%s1639 + $0x60] sm:$0xff]
      %v1653 = vld [vmem:[%s1639 + $0x68] sm:$0xff]
      %v1654 = vld [vmem:[%s1639 + $0x70] sm:$0xff]
      %v1655 = vld [vmem:[%s1639 + $0x78] sm:$0xff]
      %v1656 = vld [vmem:[%s1639 + $0x80] sm:$0xff]
      %v1657 = vld [vmem:[%s1639 + $0x88] sm:$0xff]
      %v1658 = vld [vmem:[%s1639 + $0x90] sm:$0xff]
      %v1659 = vld [vmem:[%s1639 + $0x98] sm:$0xff]
      %v1660 = vld [vmem:[%s1639 + $0xa0] sm:$0xff]
      %v1661 = vld [vmem:[%s1639 + $0xa8] sm:$0xff]
      %v1662 = vld [vmem:[%s1639 + $0xb0] sm:$0xff]
      %v1663 = vld [vmem:[%s1639 + $0xb8] sm:$0xff]
      %v1664 = vld [vmem:[%s1639 + $0xc0] sm:$0xff]
      %v1665 = vld [vmem:[%s1639 + $0xc8] sm:$0xff]
      %v1666 = vld [vmem:[%s1639 + $0xd0] sm:$0xff]
      %v1667 = vld [vmem:[%s1639 + $0xd8] sm:$0xff]
      %v1668 = vld [vmem:[%s1639 + $0xe0] sm:$0xff]
      %v1669 = vld [vmem:[%s1639 + $0xe8] sm:$0xff]
      %v1670 = vld [vmem:[%s1639 + $0xf0] sm:$0xff]
      %v1671 = vld [vmem:[%s1639 + $0xf8] sm:$0xff]
      %v1672 = vld [vmem:[%s1639 + $0x100] sm:$0xff]
      %v1673 = vld [vmem:[%s1639 + $0x108] sm:$0xff]
      %v1674 = vld [vmem:[%s1639 + $0x110] sm:$0xff]
      %v1675 = vld [vmem:[%s1639 + $0x118] sm:$0xff]
      %v1676 = vld [vmem:[%s1639 + $0x120] sm:$0xff]
      %v1677 = vld [vmem:[%s1639 + $0x128] sm:$0xff]
      %v1678 = vld [vmem:[%s1639 + $0x130] sm:$0xff]
      %v1679 = vld [vmem:[%s1639 + $0x138] sm:$0xff]
      %v1680 = vld [vmem:[%s1639 + $0x140] sm:$0xff]
      %v1681 = vld [vmem:[%s1639 + $0x148] sm:$0xff]
      %v1682 = vld [vmem:[%s1639 + $0x150] sm:$0xff]
      %v1683 = vld [vmem:[%s1639 + $0x158] sm:$0xff]
      %v1684 = vld [vmem:[%s1639 + $0x160] sm:$0xff]
      %v1685 = vld [vmem:[%s1639 + $0x168] sm:$0xff]
      %v1686 = vld [vmem:[%s1639 + $0x170] sm:$0xff]
      %v1687 = vld [vmem:[%s1639 + $0x178] sm:$0xff]
      %v1688 = vld [vmem:[%s1639 + $0x180] sm:$0xff]
      %v1689 = vld [vmem:[%s1639 + $0x188] sm:$0xff]
      %v1690 = vld [vmem:[%s1639 + $0x190] sm:$0xff]
      %v1691 = vld [vmem:[%s1639 + $0x198] sm:$0xff]
      %v1692 = vld [vmem:[%s1639 + $0x1a0] sm:$0xff]
      %v1693 = vld [vmem:[%s1639 + $0x1a8] sm:$0xff]
      %s1694 = scalar_lea.vmem %s2, %s1638
      %v1695 = vld [vmem:[%s1694] sm:$0xff]
      %v1696 = vld [vmem:[%s1694 + $0x8] sm:$0xff]
      %v1697 = vld [vmem:[%s1694 + $0x10] sm:$0xff]
      %v1698 = vld [vmem:[%s1694 + $0x18] sm:$0xff]
      %v1699 = vld [vmem:[%s1694 + $0x20] sm:$0xff]
      %v1700 = vld [vmem:[%s1694 + $0x28] sm:$0xff]
      %v1701 = vld [vmem:[%s1694 + $0x30] sm:$0xff]
      %v1702 = vld [vmem:[%s1694 + $0x38] sm:$0xff]
      %v1703 = vld [vmem:[%s1694 + $0x40] sm:$0xff]
      %v1704 = vld [vmem:[%s1694 + $0x48] sm:$0xff]
      %v1705 = vld [vmem:[%s1694 + $0x50] sm:$0xff]
      %v1706 = vld [vmem:[%s1694 + $0x58] sm:$0xff]
      %v1707 = vld [vmem:[%s1694 + $0x60] sm:$0xff]
      %v1708 = vld [vmem:[%s1694 + $0x68] sm:$0xff]
      %v1709 = vld [vmem:[%s1694 + $0x70] sm:$0xff]
      %v1710 = vld [vmem:[%s1694 + $0x78] sm:$0xff]
      %v1711 = vld [vmem:[%s1694 + $0x80] sm:$0xff]
      %v1712 = vld [vmem:[%s1694 + $0x88] sm:$0xff]
      %v1713 = vld [vmem:[%s1694 + $0x90] sm:$0xff]
      %v1714 = vld [vmem:[%s1694 + $0x98] sm:$0xff]
      %v1715 = vld [vmem:[%s1694 + $0xa0] sm:$0xff]
      %v1716 = vld [vmem:[%s1694 + $0xa8] sm:$0xff]
      %v1717 = vld [vmem:[%s1694 + $0xb0] sm:$0xff]
      %v1718 = vld [vmem:[%s1694 + $0xb8] sm:$0xff]
      %v1719 = vld [vmem:[%s1694 + $0xc0] sm:$0xff]
      %v1720 = vld [vmem:[%s1694 + $0xc8] sm:$0xff]
      %v1721 = vld [vmem:[%s1694 + $0xd0] sm:$0xff]
      %v1722 = vld [vmem:[%s1694 + $0xd8] sm:$0xff]
      %v1723 = vld [vmem:[%s1694 + $0xe0] sm:$0xff]
      %v1724 = vld [vmem:[%s1694 + $0xe8] sm:$0xff]
      %v1725 = vld [vmem:[%s1694 + $0xf0] sm:$0xff]
      %v1726 = vld [vmem:[%s1694 + $0xf8] sm:$0xff]
      %v1727 = vld [vmem:[%s1694 + $0x100] sm:$0xff]
      %v1728 = vld [vmem:[%s1694 + $0x108] sm:$0xff]
      %v1729 = vld [vmem:[%s1694 + $0x110] sm:$0xff]
      %v1730 = vld [vmem:[%s1694 + $0x118] sm:$0xff]
      %v1731 = vld [vmem:[%s1694 + $0x120] sm:$0xff]
      %v1732 = vld [vmem:[%s1694 + $0x128] sm:$0xff]
      %v1733 = vld [vmem:[%s1694 + $0x130] sm:$0xff]
      %v1734 = vld [vmem:[%s1694 + $0x138] sm:$0xff]
      %v1735 = vld [vmem:[%s1694 + $0x140] sm:$0xff]
      %v1736 = vld [vmem:[%s1694 + $0x148] sm:$0xff]
      %v1737 = vld [vmem:[%s1694 + $0x150] sm:$0xff]
      %v1738 = vld [vmem:[%s1694 + $0x158] sm:$0xff]
      %v1739 = vld [vmem:[%s1694 + $0x160] sm:$0xff]
      %v1740 = vld [vmem:[%s1694 + $0x168] sm:$0xff]
      %v1741 = vld [vmem:[%s1694 + $0x170] sm:$0xff]
      %v1742 = vld [vmem:[%s1694 + $0x178] sm:$0xff]
      %v1743 = vld [vmem:[%s1694 + $0x180] sm:$0xff]
      %v1744 = vld [vmem:[%s1694 + $0x188] sm:$0xff]
      %v1745 = vld [vmem:[%s1694 + $0x190] sm:$0xff]
      %v1746 = vld [vmem:[%s1694 + $0x198] sm:$0xff]
      %v1747 = vld [vmem:[%s1694 + $0x1a0] sm:$0xff]
      %v1748 = vld [vmem:[%s1694 + $0x1a8] sm:$0xff]
      %v1749 = vmul.f32 %v1640, %v1107
      %v1750 = vmul.f32 %v1641, %v1117
      %v1751 = vmul.f32 %v1642, %v1127
      %v1752 = vmul.f32 %v1643, %v1137
      %v1753 = vmul.f32 %v1644, %v1147
      %v1754 = vmul.f32 %v1645, %v1157
      %v1755 = vmul.f32 %v1646, %v1167
      %v1756 = vmul.f32 %v1647, %v1177
      %v1757 = vmul.f32 %v1648, %v1187
      %v1758 = vmul.f32 %v1649, %v1197
      %v1759 = vmul.f32 %v1650, %v1207
      %v1760 = vmul.f32 %v1651, %v1217
      %v1761 = vmul.f32 %v1652, %v1227
      %v1762 = vmul.f32 %v1653, %v1237
      %v1763 = vmul.f32 %v1654, %v1247
      %v1764 = vmul.f32 %v1655, %v1257
      %v1765 = vmul.f32 %v1656, %v1267
      %v1766 = vmul.f32 %v1657, %v1277
      %v1767 = vmul.f32 %v1658, %v1287
      %v1768 = vmul.f32 %v1659, %v1297
      %v1769 = vmul.f32 %v1660, %v1307
      %v1770 = vmul.f32 %v1661, %v1317
      %v1771 = vmul.f32 %v1662, %v1327
      %v1772 = vmul.f32 %v1663, %v1337
      %v1773 = vmul.f32 %v1664, %v1347
      %v1774 = vmul.f32 %v1665, %v1357
      %v1775 = vmul.f32 %v1666, %v1367
      %v1776 = vmul.f32 %v1667, %v1377
      %v1777 = vmul.f32 %v1668, %v1387
      %v1778 = vmul.f32 %v1669, %v1397
      %v1779 = vmul.f32 %v1670, %v1407
      %v1780 = vmul.f32 %v1671, %v1417
      %v1781 = vmul.f32 %v1672, %v1427
      %v1782 = vmul.f32 %v1673, %v1437
      %v1783 = vmul.f32 %v1674, %v1447
      %v1784 = vmul.f32 %v1675, %v1457
      %v1785 = vmul.f32 %v1676, %v1467
      %v1786 = vmul.f32 %v1677, %v1477
      %v1787 = vmul.f32 %v1678, %v1487
      %v1788 = vmul.f32 %v1679, %v1497
      %v1789 = vmul.f32 %v1680, %v1507
      %v1790 = vmul.f32 %v1681, %v1517
      %v1791 = vmul.f32 %v1682, %v1527
      %v1792 = vmul.f32 %v1683, %v1537
      %v1793 = vmul.f32 %v1684, %v1547
      %v1794 = vmul.f32 %v1685, %v1557
      %v1795 = vmul.f32 %v1686, %v1567
      %v1796 = vmul.f32 %v1687, %v1577
      %v1797 = vmul.f32 %v1688, %v1587
      %v1798 = vmul.f32 %v1689, %v1597
      %v1799 = vmul.f32 %v1690, %v1607
      %v1800 = vmul.f32 %v1691, %v1617
      %v1801 = vmul.f32 %v1692, %v1627
      %v1802 = vmul.f32 %v1693, %v1637
      %1804 = vset.pattern.permute.xlu0 0
      %1805 = vperm.xlu0 %1804, %v1749
      %v1806 = vpop.permute.xlu0 %1805
      %1809 = vset.pattern.permute.xlu0 0
      %1810 = vperm.xlu0 %1809, %v1750
      %v1811 = vpop.permute.xlu0 %1810
      %1814 = vset.pattern.permute.xlu0 0
      %1815 = vperm.xlu0 %1814, %v1751
      %v1816 = vpop.permute.xlu0 %1815
      %1819 = vset.pattern.permute.xlu0 0
      %1820 = vperm.xlu0 %1819, %v1752
      %v1821 = vpop.permute.xlu0 %1820
      %1824 = vset.pattern.permute.xlu0 0
      %1825 = vperm.xlu0 %1824, %v1753
      %v1826 = vpop.permute.xlu0 %1825
      %1829 = vset.pattern.permute.xlu0 0
      %1830 = vperm.xlu0 %1829, %v1754
      %v1831 = vpop.permute.xlu0 %1830
      %1834 = vset.pattern.permute.xlu0 0
      %1835 = vperm.xlu0 %1834, %v1755
      %v1836 = vpop.permute.xlu0 %1835
      %1839 = vset.pattern.permute.xlu0 0
      %1840 = vperm.xlu0 %1839, %v1756
      %v1841 = vpop.permute.xlu0 %1840
      %1844 = vset.pattern.permute.xlu0 0
      %1845 = vperm.xlu0 %1844, %v1757
      %v1846 = vpop.permute.xlu0 %1845
      %1849 = vset.pattern.permute.xlu0 0
      %1850 = vperm.xlu0 %1849, %v1758
      %v1851 = vpop.permute.xlu0 %1850
      %1854 = vset.pattern.permute.xlu0 0
      %1855 = vperm.xlu0 %1854, %v1759
      %v1856 = vpop.permute.xlu0 %1855
      %1859 = vset.pattern.permute.xlu0 0
      %1860 = vperm.xlu0 %1859, %v1760
      %v1861 = vpop.permute.xlu0 %1860
      %1864 = vset.pattern.permute.xlu0 0
      %1865 = vperm.xlu0 %1864, %v1761
      %v1866 = vpop.permute.xlu0 %1865
      %1869 = vset.pattern.permute.xlu0 0
      %1870 = vperm.xlu0 %1869, %v1762
      %v1871 = vpop.permute.xlu0 %1870
      %1874 = vset.pattern.permute.xlu0 0
      %1875 = vperm.xlu0 %1874, %v1763
      %v1876 = vpop.permute.xlu0 %1875
      %1879 = vset.pattern.permute.xlu0 0
      %1880 = vperm.xlu0 %1879, %v1764
      %v1881 = vpop.permute.xlu0 %1880
      %1884 = vset.pattern.permute.xlu0 0
      %1885 = vperm.xlu0 %1884, %v1765
      %v1886 = vpop.permute.xlu0 %1885
      %1889 = vset.pattern.permute.xlu0 0
      %1890 = vperm.xlu0 %1889, %v1766
      %v1891 = vpop.permute.xlu0 %1890
      %1894 = vset.pattern.permute.xlu0 0
      %1895 = vperm.xlu0 %1894, %v1767
      %v1896 = vpop.permute.xlu0 %1895
      %1899 = vset.pattern.permute.xlu0 0
      %1900 = vperm.xlu0 %1899, %v1768
      %v1901 = vpop.permute.xlu0 %1900
      %1904 = vset.pattern.permute.xlu0 0
      %1905 = vperm.xlu0 %1904, %v1769
      %v1906 = vpop.permute.xlu0 %1905
      %1909 = vset.pattern.permute.xlu0 0
      %1910 = vperm.xlu0 %1909, %v1770
      %v1911 = vpop.permute.xlu0 %1910
      %1914 = vset.pattern.permute.xlu0 0
      %1915 = vperm.xlu0 %1914, %v1771
      %v1916 = vpop.permute.xlu0 %1915
      %1919 = vset.pattern.permute.xlu0 0
      %1920 = vperm.xlu0 %1919, %v1772
      %v1921 = vpop.permute.xlu0 %1920
      %1924 = vset.pattern.permute.xlu0 0
      %1925 = vperm.xlu0 %1924, %v1773
      %v1926 = vpop.permute.xlu0 %1925
      %1929 = vset.pattern.permute.xlu0 0
      %1930 = vperm.xlu0 %1929, %v1774
      %v1931 = vpop.permute.xlu0 %1930
      %1934 = vset.pattern.permute.xlu0 0
      %1935 = vperm.xlu0 %1934, %v1775
      %v1936 = vpop.permute.xlu0 %1935
      %1939 = vset.pattern.permute.xlu0 0
      %1940 = vperm.xlu0 %1939, %v1776
      %v1941 = vpop.permute.xlu0 %1940
      %1944 = vset.pattern.permute.xlu0 0
      %1945 = vperm.xlu0 %1944, %v1777
      %v1946 = vpop.permute.xlu0 %1945
      %1949 = vset.pattern.permute.xlu0 0
      %1950 = vperm.xlu0 %1949, %v1778
      %v1951 = vpop.permute.xlu0 %1950
      %1954 = vset.pattern.permute.xlu0 0
      %1955 = vperm.xlu0 %1954, %v1779
      %v1956 = vpop.permute.xlu0 %1955
      %1959 = vset.pattern.permute.xlu0 0
      %1960 = vperm.xlu0 %1959, %v1780
      %v1961 = vpop.permute.xlu0 %1960
      %1964 = vset.pattern.permute.xlu0 0
      %1965 = vperm.xlu0 %1964, %v1781
      %v1966 = vpop.permute.xlu0 %1965
      %1969 = vset.pattern.permute.xlu0 0
      %1970 = vperm.xlu0 %1969, %v1782
      %v1971 = vpop.permute.xlu0 %1970
      %1974 = vset.pattern.permute.xlu0 0
      %1975 = vperm.xlu0 %1974, %v1783
      %v1976 = vpop.permute.xlu0 %1975
      %1979 = vset.pattern.permute.xlu0 0
      %1980 = vperm.xlu0 %1979, %v1784
      %v1981 = vpop.permute.xlu0 %1980
      %1984 = vset.pattern.permute.xlu0 0
      %1985 = vperm.xlu0 %1984, %v1785
      %v1986 = vpop.permute.xlu0 %1985
      %1989 = vset.pattern.permute.xlu0 0
      %1990 = vperm.xlu0 %1989, %v1786
      %v1991 = vpop.permute.xlu0 %1990
      %1994 = vset.pattern.permute.xlu0 0
      %1995 = vperm.xlu0 %1994, %v1787
      %v1996 = vpop.permute.xlu0 %1995
      %1999 = vset.pattern.permute.xlu0 0
      %2000 = vperm.xlu0 %1999, %v1788
      %v2001 = vpop.permute.xlu0 %2000
      %2004 = vset.pattern.permute.xlu0 0
      %2005 = vperm.xlu0 %2004, %v1789
      %v2006 = vpop.permute.xlu0 %2005
      %2009 = vset.pattern.permute.xlu0 0
      %2010 = vperm.xlu0 %2009, %v1790
      %v2011 = vpop.permute.xlu0 %2010
      %2014 = vset.pattern.permute.xlu0 0
      %2015 = vperm.xlu0 %2014, %v1791
      %v2016 = vpop.permute.xlu0 %2015
      %2019 = vset.pattern.permute.xlu0 0
      %2020 = vperm.xlu0 %2019, %v1792
      %v2021 = vpop.permute.xlu0 %2020
      %2024 = vset.pattern.permute.xlu0 0
      %2025 = vperm.xlu0 %2024, %v1793
      %v2026 = vpop.permute.xlu0 %2025
      %2029 = vset.pattern.permute.xlu0 0
      %2030 = vperm.xlu0 %2029, %v1794
      %v2031 = vpop.permute.xlu0 %2030
      %2034 = vset.pattern.permute.xlu0 0
      %2035 = vperm.xlu0 %2034, %v1795
      %v2036 = vpop.permute.xlu0 %2035
      %2039 = vset.pattern.permute.xlu0 0
      %2040 = vperm.xlu0 %2039, %v1796
      %v2041 = vpop.permute.xlu0 %2040
      %2044 = vset.pattern.permute.xlu0 0
      %2045 = vperm.xlu0 %2044, %v1797
      %v2046 = vpop.permute.xlu0 %2045
      %2049 = vset.pattern.permute.xlu0 0
      %2050 = vperm.xlu0 %2049, %v1798
      %v2051 = vpop.permute.xlu0 %2050
      %2054 = vset.pattern.permute.xlu0 0
      %2055 = vperm.xlu0 %2054, %v1799
      %v2056 = vpop.permute.xlu0 %2055
      %2059 = vset.pattern.permute.xlu0 0
      %2060 = vperm.xlu0 %2059, %v1800
      %v2061 = vpop.permute.xlu0 %2060
      %2064 = vset.pattern.permute.xlu0 0
      %2065 = vperm.xlu0 %2064, %v1801
      %v2066 = vpop.permute.xlu0 %2065
      %2069 = vset.pattern.permute.xlu0 0
      %2070 = vperm.xlu0 %2069, %v1802
      %v2071 = vpop.permute.xlu0 %2070
      %v2073 = vmul.f32 %v558, %v1806
      %v2074 = vmul.f32 %v559, %v1806
      %v2075 = vmul.f32 %v560, %v1811
      %v2076 = vmul.f32 %v561, %v1811
      %v2077 = vmul.f32 %v562, %v1816
      %v2078 = vmul.f32 %v563, %v1816
      %v2079 = vmul.f32 %v564, %v1821
      %v2080 = vmul.f32 %v565, %v1821
      %v2081 = vmul.f32 %v566, %v1826
      %v2082 = vmul.f32 %v567, %v1826
      %v2083 = vmul.f32 %v568, %v1831
      %v2084 = vmul.f32 %v569, %v1831
      %v2085 = vmul.f32 %v570, %v1836
      %v2086 = vmul.f32 %v571, %v1836
      %v2087 = vmul.f32 %v572, %v1841
      %v2088 = vmul.f32 %v573, %v1841
      %v2089 = vmul.f32 %v574, %v1846
      %v2090 = vmul.f32 %v575, %v1846
      %v2091 = vmul.f32 %v576, %v1851
      %v2092 = vmul.f32 %v577, %v1851
      %v2093 = vmul.f32 %v578, %v1856
      %v2094 = vmul.f32 %v579, %v1856
      %v2095 = vmul.f32 %v580, %v1861
      %v2096 = vmul.f32 %v581, %v1861
      %v2097 = vmul.f32 %v582, %v1866
      %v2098 = vmul.f32 %v583, %v1866
      %v2099 = vmul.f32 %v584, %v1871
      %v2100 = vmul.f32 %v585, %v1871
      %v2101 = vmul.f32 %v586, %v1876
      %v2102 = vmul.f32 %v587, %v1876
      %v2103 = vmul.f32 %v588, %v1881
      %v2104 = vmul.f32 %v589, %v1881
      %v2105 = vmul.f32 %v590, %v1886
      %v2106 = vmul.f32 %v591, %v1886
      %v2107 = vmul.f32 %v592, %v1891
      %v2108 = vmul.f32 %v593, %v1891
      %v2109 = vmul.f32 %v594, %v1896
      %v2110 = vmul.f32 %v595, %v1896
      %v2111 = vmul.f32 %v596, %v1901
      %v2112 = vmul.f32 %v597, %v1901
      %v2113 = vmul.f32 %v598, %v1906
      %v2114 = vmul.f32 %v599, %v1906
      %v2115 = vmul.f32 %v600, %v1911
      %v2116 = vmul.f32 %v601, %v1911
      %v2117 = vmul.f32 %v602, %v1916
      %v2118 = vmul.f32 %v603, %v1916
      %v2119 = vmul.f32 %v604, %v1921
      %v2120 = vmul.f32 %v605, %v1921
      %v2121 = vmul.f32 %v606, %v1926
      %v2122 = vmul.f32 %v607, %v1926
      %v2123 = vmul.f32 %v608, %v1931
      %v2124 = vmul.f32 %v609, %v1931
      %v2125 = vmul.f32 %v610, %v1936
      %v2126 = vmul.f32 %v611, %v1936
      %v2127 = vmul.f32 %v612, %v1941
      %v2128 = vmul.f32 %v613, %v1941
      %v2129 = vmul.f32 %v614, %v1946
      %v2130 = vmul.f32 %v615, %v1946
      %v2131 = vmul.f32 %v616, %v1951
      %v2132 = vmul.f32 %v617, %v1951
      %v2133 = vmul.f32 %v618, %v1956
      %v2134 = vmul.f32 %v619, %v1956
      %v2135 = vmul.f32 %v620, %v1961
      %v2136 = vmul.f32 %v621, %v1961
      %v2137 = vmul.f32 %v622, %v1966
      %v2138 = vmul.f32 %v623, %v1966
      %v2139 = vmul.f32 %v624, %v1971
      %v2140 = vmul.f32 %v625, %v1971
      %v2141 = vmul.f32 %v626, %v1976
      %v2142 = vmul.f32 %v627, %v1976
      %v2143 = vmul.f32 %v628, %v1981
      %v2144 = vmul.f32 %v629, %v1981
      %v2145 = vmul.f32 %v630, %v1986
      %v2146 = vmul.f32 %v631, %v1986
      %v2147 = vmul.f32 %v632, %v1991
      %v2148 = vmul.f32 %v633, %v1991
      %v2149 = vmul.f32 %v634, %v1996
      %v2150 = vmul.f32 %v635, %v1996
      %v2151 = vmul.f32 %v636, %v2001
      %v2152 = vmul.f32 %v637, %v2001
      %v2153 = vmul.f32 %v638, %v2006
      %v2154 = vmul.f32 %v639, %v2006
      %v2155 = vmul.f32 %v640, %v2011
      %v2156 = vmul.f32 %v641, %v2011
      %v2157 = vmul.f32 %v642, %v2016
      %v2158 = vmul.f32 %v643, %v2016
      %v2159 = vmul.f32 %v644, %v2021
      %v2160 = vmul.f32 %v645, %v2021
      %v2161 = vmul.f32 %v646, %v2026
      %v2162 = vmul.f32 %v647, %v2026
      %v2163 = vmul.f32 %v648, %v2031
      %v2164 = vmul.f32 %v649, %v2031
      %v2165 = vmul.f32 %v650, %v2036
      %v2166 = vmul.f32 %v651, %v2036
      %v2167 = vmul.f32 %v652, %v2041
      %v2168 = vmul.f32 %v653, %v2041
      %v2169 = vmul.f32 %v654, %v2046
      %v2170 = vmul.f32 %v655, %v2046
      %v2171 = vmul.f32 %v656, %v2051
      %v2172 = vmul.f32 %v657, %v2051
      %v2173 = vmul.f32 %v658, %v2056
      %v2174 = vmul.f32 %v659, %v2056
      %v2175 = vmul.f32 %v660, %v2061
      %v2176 = vmul.f32 %v661, %v2061
      %v2177 = vmul.f32 %v662, %v2066
      %v2178 = vmul.f32 %v663, %v2066
      %v2179 = vmul.f32 %v664, %v2071
      %v2180 = vmul.f32 %v665, %v2071
      %2182 = vset.pattern.permute.xlu0 0
      %2183 = vperm.xlu0 %2182, %v1695
      %v2184 = vpop.permute.xlu0 %2183
      %2187 = vset.pattern.permute.xlu0 0
      %2188 = vperm.xlu0 %2187, %v1696
      %v2189 = vpop.permute.xlu0 %2188
      %2192 = vset.pattern.permute.xlu0 0
      %2193 = vperm.xlu0 %2192, %v1697
      %v2194 = vpop.permute.xlu0 %2193
      %2197 = vset.pattern.permute.xlu0 0
      %2198 = vperm.xlu0 %2197, %v1698
      %v2199 = vpop.permute.xlu0 %2198
      %2202 = vset.pattern.permute.xlu0 0
      %2203 = vperm.xlu0 %2202, %v1699
      %v2204 = vpop.permute.xlu0 %2203
      %2207 = vset.pattern.permute.xlu0 0
      %2208 = vperm.xlu0 %2207, %v1700
      %v2209 = vpop.permute.xlu0 %2208
      %2212 = vset.pattern.permute.xlu0 0
      %2213 = vperm.xlu0 %2212, %v1701
      %v2214 = vpop.permute.xlu0 %2213
      %2217 = vset.pattern.permute.xlu0 0
      %2218 = vperm.xlu0 %2217, %v1702
      %v2219 = vpop.permute.xlu0 %2218
      %2222 = vset.pattern.permute.xlu0 0
      %2223 = vperm.xlu0 %2222, %v1703
      %v2224 = vpop.permute.xlu0 %2223
      %2227 = vset.pattern.permute.xlu0 0
      %2228 = vperm.xlu0 %2227, %v1704
      %v2229 = vpop.permute.xlu0 %2228
      %2232 = vset.pattern.permute.xlu0 0
      %2233 = vperm.xlu0 %2232, %v1705
      %v2234 = vpop.permute.xlu0 %2233
      %2237 = vset.pattern.permute.xlu0 0
      %2238 = vperm.xlu0 %2237, %v1706
      %v2239 = vpop.permute.xlu0 %2238
      %2242 = vset.pattern.permute.xlu0 0
      %2243 = vperm.xlu0 %2242, %v1707
      %v2244 = vpop.permute.xlu0 %2243
      %2247 = vset.pattern.permute.xlu0 0
      %2248 = vperm.xlu0 %2247, %v1708
      %v2249 = vpop.permute.xlu0 %2248
      %2252 = vset.pattern.permute.xlu0 0
      %2253 = vperm.xlu0 %2252, %v1709
      %v2254 = vpop.permute.xlu0 %2253
      %2257 = vset.pattern.permute.xlu0 0
      %2258 = vperm.xlu0 %2257, %v1710
      %v2259 = vpop.permute.xlu0 %2258
      %2262 = vset.pattern.permute.xlu0 0
      %2263 = vperm.xlu0 %2262, %v1711
      %v2264 = vpop.permute.xlu0 %2263
      %2267 = vset.pattern.permute.xlu0 0
      %2268 = vperm.xlu0 %2267, %v1712
      %v2269 = vpop.permute.xlu0 %2268
      %2272 = vset.pattern.permute.xlu0 0
      %2273 = vperm.xlu0 %2272, %v1713
      %v2274 = vpop.permute.xlu0 %2273
      %2277 = vset.pattern.permute.xlu0 0
      %2278 = vperm.xlu0 %2277, %v1714
      %v2279 = vpop.permute.xlu0 %2278
      %2282 = vset.pattern.permute.xlu0 0
      %2283 = vperm.xlu0 %2282, %v1715
      %v2284 = vpop.permute.xlu0 %2283
      %2287 = vset.pattern.permute.xlu0 0
      %2288 = vperm.xlu0 %2287, %v1716
      %v2289 = vpop.permute.xlu0 %2288
      %2292 = vset.pattern.permute.xlu0 0
      %2293 = vperm.xlu0 %2292, %v1717
      %v2294 = vpop.permute.xlu0 %2293
      %2297 = vset.pattern.permute.xlu0 0
      %2298 = vperm.xlu0 %2297, %v1718
      %v2299 = vpop.permute.xlu0 %2298
      %2302 = vset.pattern.permute.xlu0 0
      %2303 = vperm.xlu0 %2302, %v1719
      %v2304 = vpop.permute.xlu0 %2303
      %2307 = vset.pattern.permute.xlu0 0
      %2308 = vperm.xlu0 %2307, %v1720
      %v2309 = vpop.permute.xlu0 %2308
      %2312 = vset.pattern.permute.xlu0 0
      %2313 = vperm.xlu0 %2312, %v1721
      %v2314 = vpop.permute.xlu0 %2313
      %2317 = vset.pattern.permute.xlu0 0
      %2318 = vperm.xlu0 %2317, %v1722
      %v2319 = vpop.permute.xlu0 %2318
      %2322 = vset.pattern.permute.xlu0 0
      %2323 = vperm.xlu0 %2322, %v1723
      %v2324 = vpop.permute.xlu0 %2323
      %2327 = vset.pattern.permute.xlu0 0
      %2328 = vperm.xlu0 %2327, %v1724
      %v2329 = vpop.permute.xlu0 %2328
      %2332 = vset.pattern.permute.xlu0 0
      %2333 = vperm.xlu0 %2332, %v1725
      %v2334 = vpop.permute.xlu0 %2333
      %2337 = vset.pattern.permute.xlu0 0
      %2338 = vperm.xlu0 %2337, %v1726
      %v2339 = vpop.permute.xlu0 %2338
      %2342 = vset.pattern.permute.xlu0 0
      %2343 = vperm.xlu0 %2342, %v1727
      %v2344 = vpop.permute.xlu0 %2343
      %2347 = vset.pattern.permute.xlu0 0
      %2348 = vperm.xlu0 %2347, %v1728
      %v2349 = vpop.permute.xlu0 %2348
      %2352 = vset.pattern.permute.xlu0 0
      %2353 = vperm.xlu0 %2352, %v1729
      %v2354 = vpop.permute.xlu0 %2353
      %2357 = vset.pattern.permute.xlu0 0
      %2358 = vperm.xlu0 %2357, %v1730
      %v2359 = vpop.permute.xlu0 %2358
      %2362 = vset.pattern.permute.xlu0 0
      %2363 = vperm.xlu0 %2362, %v1731
      %v2364 = vpop.permute.xlu0 %2363
      %2367 = vset.pattern.permute.xlu0 0
      %2368 = vperm.xlu0 %2367, %v1732
      %v2369 = vpop.permute.xlu0 %2368
      %2372 = vset.pattern.permute.xlu0 0
      %2373 = vperm.xlu0 %2372, %v1733
      %v2374 = vpop.permute.xlu0 %2373
      %2377 = vset.pattern.permute.xlu0 0
      %2378 = vperm.xlu0 %2377, %v1734
      %v2379 = vpop.permute.xlu0 %2378
      %2382 = vset.pattern.permute.xlu0 0
      %2383 = vperm.xlu0 %2382, %v1735
      %v2384 = vpop.permute.xlu0 %2383
      %2387 = vset.pattern.permute.xlu0 0
      %2388 = vperm.xlu0 %2387, %v1736
      %v2389 = vpop.permute.xlu0 %2388
      %2392 = vset.pattern.permute.xlu0 0
      %2393 = vperm.xlu0 %2392, %v1737
      %v2394 = vpop.permute.xlu0 %2393
      %2397 = vset.pattern.permute.xlu0 0
      %2398 = vperm.xlu0 %2397, %v1738
      %v2399 = vpop.permute.xlu0 %2398
      %2402 = vset.pattern.permute.xlu0 0
      %2403 = vperm.xlu0 %2402, %v1739
      %v2404 = vpop.permute.xlu0 %2403
      %2407 = vset.pattern.permute.xlu0 0
      %2408 = vperm.xlu0 %2407, %v1740
      %v2409 = vpop.permute.xlu0 %2408
      %2412 = vset.pattern.permute.xlu0 0
      %2413 = vperm.xlu0 %2412, %v1741
      %v2414 = vpop.permute.xlu0 %2413
      %2417 = vset.pattern.permute.xlu0 0
      %2418 = vperm.xlu0 %2417, %v1742
      %v2419 = vpop.permute.xlu0 %2418
      %2422 = vset.pattern.permute.xlu0 0
      %2423 = vperm.xlu0 %2422, %v1743
      %v2424 = vpop.permute.xlu0 %2423
      %2427 = vset.pattern.permute.xlu0 0
      %2428 = vperm.xlu0 %2427, %v1744
      %v2429 = vpop.permute.xlu0 %2428
      %2432 = vset.pattern.permute.xlu0 0
      %2433 = vperm.xlu0 %2432, %v1745
      %v2434 = vpop.permute.xlu0 %2433
      %2437 = vset.pattern.permute.xlu0 0
      %2438 = vperm.xlu0 %2437, %v1746
      %v2439 = vpop.permute.xlu0 %2438
      %2442 = vset.pattern.permute.xlu0 0
      %2443 = vperm.xlu0 %2442, %v1747
      %v2444 = vpop.permute.xlu0 %2443
      %2447 = vset.pattern.permute.xlu0 0
      %2448 = vperm.xlu0 %2447, %v1748
      %v2449 = vpop.permute.xlu0 %2448
      %v2451 = vadd.f32 %v2073, %v2184
      %v2452 = vadd.f32 %v2074, %v2184
      %v2453 = vadd.f32 %v2075, %v2189
      %v2454 = vadd.f32 %v2076, %v2189
      %v2455 = vadd.f32 %v2077, %v2194
      %v2456 = vadd.f32 %v2078, %v2194
      %v2457 = vadd.f32 %v2079, %v2199
      %v2458 = vadd.f32 %v2080, %v2199
      %v2459 = vadd.f32 %v2081, %v2204
      %v2460 = vadd.f32 %v2082, %v2204
      %v2461 = vadd.f32 %v2083, %v2209
      %v2462 = vadd.f32 %v2084, %v2209
      %v2463 = vadd.f32 %v2085, %v2214
      %v2464 = vadd.f32 %v2086, %v2214
      %v2465 = vadd.f32 %v2087, %v2219
      %v2466 = vadd.f32 %v2088, %v2219
      %v2467 = vadd.f32 %v2089, %v2224
      %v2468 = vadd.f32 %v2090, %v2224
      %v2469 = vadd.f32 %v2091, %v2229
      %v2470 = vadd.f32 %v2092, %v2229
      %v2471 = vadd.f32 %v2093, %v2234
      %v2472 = vadd.f32 %v2094, %v2234
      %v2473 = vadd.f32 %v2095, %v2239
      %v2474 = vadd.f32 %v2096, %v2239
      %v2475 = vadd.f32 %v2097, %v2244
      %v2476 = vadd.f32 %v2098, %v2244
      %v2477 = vadd.f32 %v2099, %v2249
      %v2478 = vadd.f32 %v2100, %v2249
      %v2479 = vadd.f32 %v2101, %v2254
      %v2480 = vadd.f32 %v2102, %v2254
      %v2481 = vadd.f32 %v2103, %v2259
      %v2482 = vadd.f32 %v2104, %v2259
      %v2483 = vadd.f32 %v2105, %v2264
      %v2484 = vadd.f32 %v2106, %v2264
      %v2485 = vadd.f32 %v2107, %v2269
      %v2486 = vadd.f32 %v2108, %v2269
      %v2487 = vadd.f32 %v2109, %v2274
      %v2488 = vadd.f32 %v2110, %v2274
      %v2489 = vadd.f32 %v2111, %v2279
      %v2490 = vadd.f32 %v2112, %v2279
      %v2491 = vadd.f32 %v2113, %v2284
      %v2492 = vadd.f32 %v2114, %v2284
      %v2493 = vadd.f32 %v2115, %v2289
      %v2494 = vadd.f32 %v2116, %v2289
      %v2495 = vadd.f32 %v2117, %v2294
      %v2496 = vadd.f32 %v2118, %v2294
      %v2497 = vadd.f32 %v2119, %v2299
      %v2498 = vadd.f32 %v2120, %v2299
      %v2499 = vadd.f32 %v2121, %v2304
      %v2500 = vadd.f32 %v2122, %v2304
      %v2501 = vadd.f32 %v2123, %v2309
      %v2502 = vadd.f32 %v2124, %v2309
      %v2503 = vadd.f32 %v2125, %v2314
      %v2504 = vadd.f32 %v2126, %v2314
      %v2505 = vadd.f32 %v2127, %v2319
      %v2506 = vadd.f32 %v2128, %v2319
      %v2507 = vadd.f32 %v2129, %v2324
      %v2508 = vadd.f32 %v2130, %v2324
      %v2509 = vadd.f32 %v2131, %v2329
      %v2510 = vadd.f32 %v2132, %v2329
      %v2511 = vadd.f32 %v2133, %v2334
      %v2512 = vadd.f32 %v2134, %v2334
      %v2513 = vadd.f32 %v2135, %v2339
      %v2514 = vadd.f32 %v2136, %v2339
      %v2515 = vadd.f32 %v2137, %v2344
      %v2516 = vadd.f32 %v2138, %v2344
      %v2517 = vadd.f32 %v2139, %v2349
      %v2518 = vadd.f32 %v2140, %v2349
      %v2519 = vadd.f32 %v2141, %v2354
      %v2520 = vadd.f32 %v2142, %v2354
      %v2521 = vadd.f32 %v2143, %v2359
      %v2522 = vadd.f32 %v2144, %v2359
      %v2523 = vadd.f32 %v2145, %v2364
      %v2524 = vadd.f32 %v2146, %v2364
      %v2525 = vadd.f32 %v2147, %v2369
      %v2526 = vadd.f32 %v2148, %v2369
      %v2527 = vadd.f32 %v2149, %v2374
      %v2528 = vadd.f32 %v2150, %v2374
      %v2529 = vadd.f32 %v2151, %v2379
      %v2530 = vadd.f32 %v2152, %v2379
      %v2531 = vadd.f32 %v2153, %v2384
      %v2532 = vadd.f32 %v2154, %v2384
      %v2533 = vadd.f32 %v2155, %v2389
      %v2534 = vadd.f32 %v2156, %v2389
      %v2535 = vadd.f32 %v2157, %v2394
      %v2536 = vadd.f32 %v2158, %v2394
      %v2537 = vadd.f32 %v2159, %v2399
      %v2538 = vadd.f32 %v2160, %v2399
      %v2539 = vadd.f32 %v2161, %v2404
      %v2540 = vadd.f32 %v2162, %v2404
      %v2541 = vadd.f32 %v2163, %v2409
      %v2542 = vadd.f32 %v2164, %v2409
      %v2543 = vadd.f32 %v2165, %v2414
      %v2544 = vadd.f32 %v2166, %v2414
      %v2545 = vadd.f32 %v2167, %v2419
      %v2546 = vadd.f32 %v2168, %v2419
      %v2547 = vadd.f32 %v2169, %v2424
      %v2548 = vadd.f32 %v2170, %v2424
      %v2549 = vadd.f32 %v2171, %v2429
      %v2550 = vadd.f32 %v2172, %v2429
      %v2551 = vadd.f32 %v2173, %v2434
      %v2552 = vadd.f32 %v2174, %v2434
      %v2553 = vadd.f32 %v2175, %v2439
      %v2554 = vadd.f32 %v2176, %v2439
      %v2555 = vadd.f32 %v2177, %v2444
      %v2556 = vadd.f32 %v2178, %v2444
      %v2557 = vadd.f32 %v2179, %v2449
      %v2558 = vadd.f32 %v2180, %v2449
      %2559 = vst [vmem:[%s177] sm:$0xff] %v2451
      %2560 = vst.msk [vmem:[%s177 + $0x8] sm:$0xff] %vm287, %v2452
      %2561 = vst [vmem:[%s177 + $0x10] sm:$0xff] %v2453
      %2562 = vst.msk [vmem:[%s177 + $0x18] sm:$0xff] %vm287, %v2454
      %2563 = vst [vmem:[%s177 + $0x20] sm:$0xff] %v2455
      %2564 = vst.msk [vmem:[%s177 + $0x28] sm:$0xff] %vm287, %v2456
      %2565 = vst [vmem:[%s177 + $0x30] sm:$0xff] %v2457
      %2566 = vst.msk [vmem:[%s177 + $0x38] sm:$0xff] %vm287, %v2458
      %2567 = vst [vmem:[%s177 + $0x40] sm:$0xff] %v2459
      %2568 = vst.msk [vmem:[%s177 + $0x48] sm:$0xff] %vm287, %v2460
      %2569 = vst [vmem:[%s177 + $0x50] sm:$0xff] %v2461
      %2570 = vst.msk [vmem:[%s177 + $0x58] sm:$0xff] %vm287, %v2462
      %2571 = vst [vmem:[%s177 + $0x60] sm:$0xff] %v2463
      %2572 = vst.msk [vmem:[%s177 + $0x68] sm:$0xff] %vm287, %v2464
      %2573 = vst [vmem:[%s177 + $0x70] sm:$0xff] %v2465
      %2574 = vst.msk [vmem:[%s177 + $0x78] sm:$0xff] %vm287, %v2466
      %2575 = vst [vmem:[%s177 + $0x80] sm:$0xff] %v2467
      %2576 = vst.msk [vmem:[%s177 + $0x88] sm:$0xff] %vm287, %v2468
      %2577 = vst [vmem:[%s177 + $0x90] sm:$0xff] %v2469
      %2578 = vst.msk [vmem:[%s177 + $0x98] sm:$0xff] %vm287, %v2470
      %2579 = vst [vmem:[%s177 + $0xa0] sm:$0xff] %v2471
      %2580 = vst.msk [vmem:[%s177 + $0xa8] sm:$0xff] %vm287, %v2472
      %2581 = vst [vmem:[%s177 + $0xb0] sm:$0xff] %v2473
      %2582 = vst.msk [vmem:[%s177 + $0xb8] sm:$0xff] %vm287, %v2474
      %2583 = vst [vmem:[%s177 + $0xc0] sm:$0xff] %v2475
      %2584 = vst.msk [vmem:[%s177 + $0xc8] sm:$0xff] %vm287, %v2476
      %2585 = vst [vmem:[%s177 + $0xd0] sm:$0xff] %v2477
      %2586 = vst.msk [vmem:[%s177 + $0xd8] sm:$0xff] %vm287, %v2478
      %2587 = vst [vmem:[%s177 + $0xe0] sm:$0xff] %v2479
      %2588 = vst.msk [vmem:[%s177 + $0xe8] sm:$0xff] %vm287, %v2480
      %2589 = vst [vmem:[%s177 + $0xf0] sm:$0xff] %v2481
      %2590 = vst.msk [vmem:[%s177 + $0xf8] sm:$0xff] %vm287, %v2482
      %2591 = vst [vmem:[%s177 + $0x100] sm:$0xff] %v2483
      %2592 = vst.msk [vmem:[%s177 + $0x108] sm:$0xff] %vm287, %v2484
      %2593 = vst [vmem:[%s177 + $0x110] sm:$0xff] %v2485
      %2594 = vst.msk [vmem:[%s177 + $0x118] sm:$0xff] %vm287, %v2486
      %2595 = vst [vmem:[%s177 + $0x120] sm:$0xff] %v2487
      %2596 = vst.msk [vmem:[%s177 + $0x128] sm:$0xff] %vm287, %v2488
      %2597 = vst [vmem:[%s177 + $0x130] sm:$0xff] %v2489
      %2598 = vst.msk [vmem:[%s177 + $0x138] sm:$0xff] %vm287, %v2490
      %2599 = vst [vmem:[%s177 + $0x140] sm:$0xff] %v2491
      %2600 = vst.msk [vmem:[%s177 + $0x148] sm:$0xff] %vm287, %v2492
      %2601 = vst [vmem:[%s177 + $0x150] sm:$0xff] %v2493
      %2602 = vst.msk [vmem:[%s177 + $0x158] sm:$0xff] %vm287, %v2494
      %2603 = vst [vmem:[%s177 + $0x160] sm:$0xff] %v2495
      %2604 = vst.msk [vmem:[%s177 + $0x168] sm:$0xff] %vm287, %v2496
      %2605 = vst [vmem:[%s177 + $0x170] sm:$0xff] %v2497
      %2606 = vst.msk [vmem:[%s177 + $0x178] sm:$0xff] %vm287, %v2498
      %2607 = vst [vmem:[%s177 + $0x180] sm:$0xff] %v2499
      %2608 = vst.msk [vmem:[%s177 + $0x188] sm:$0xff] %vm287, %v2500
      %2609 = vst [vmem:[%s177 + $0x190] sm:$0xff] %v2501
      %2610 = vst.msk [vmem:[%s177 + $0x198] sm:$0xff] %vm287, %v2502
      %2611 = vst [vmem:[%s177 + $0x1a0] sm:$0xff] %v2503
      %2612 = vst.msk [vmem:[%s177 + $0x1a8] sm:$0xff] %vm287, %v2504
      %2613 = vst [vmem:[%s177 + $0x1b0] sm:$0xff] %v2505
      %2614 = vst.msk [vmem:[%s177 + $0x1b8] sm:$0xff] %vm287, %v2506
      %2615 = vst [vmem:[%s177 + $0x1c0] sm:$0xff] %v2507
      %2616 = vst.msk [vmem:[%s177 + $0x1c8] sm:$0xff] %vm287, %v2508
      %2617 = vst [vmem:[%s177 + $0x1d0] sm:$0xff] %v2509
      %2618 = vst.msk [vmem:[%s177 + $0x1d8] sm:$0xff] %vm287, %v2510
      %2619 = vst [vmem:[%s177 + $0x1e0] sm:$0xff] %v2511
      %2620 = vst.msk [vmem:[%s177 + $0x1e8] sm:$0xff] %vm287, %v2512
      %2621 = vst [vmem:[%s177 + $0x1f0] sm:$0xff] %v2513
      %2622 = vst.msk [vmem:[%s177 + $0x1f8] sm:$0xff] %vm287, %v2514
      %2623 = vst [vmem:[%s177 + $0x200] sm:$0xff] %v2515
      %2624 = vst.msk [vmem:[%s177 + $0x208] sm:$0xff] %vm287, %v2516
      %2625 = vst [vmem:[%s177 + $0x210] sm:$0xff] %v2517
      %2626 = vst.msk [vmem:[%s177 + $0x218] sm:$0xff] %vm287, %v2518
      %2627 = vst [vmem:[%s177 + $0x220] sm:$0xff] %v2519
      %2628 = vst.msk [vmem:[%s177 + $0x228] sm:$0xff] %vm287, %v2520
      %2629 = vst [vmem:[%s177 + $0x230] sm:$0xff] %v2521
      %2630 = vst.msk [vmem:[%s177 + $0x238] sm:$0xff] %vm287, %v2522
      %2631 = vst [vmem:[%s177 + $0x240] sm:$0xff] %v2523
      %2632 = vst.msk [vmem:[%s177 + $0x248] sm:$0xff] %vm287, %v2524
      %2633 = vst [vmem:[%s177 + $0x250] sm:$0xff] %v2525
      %2634 = vst.msk [vmem:[%s177 + $0x258] sm:$0xff] %vm287, %v2526
      %2635 = vst [vmem:[%s177 + $0x260] sm:$0xff] %v2527
      %2636 = vst.msk [vmem:[%s177 + $0x268] sm:$0xff] %vm287, %v2528
      %2637 = vst [vmem:[%s177 + $0x270] sm:$0xff] %v2529
      %2638 = vst.msk [vmem:[%s177 + $0x278] sm:$0xff] %vm287, %v2530
      %2639 = vst [vmem:[%s177 + $0x280] sm:$0xff] %v2531
      %2640 = vst.msk [vmem:[%s177 + $0x288] sm:$0xff] %vm287, %v2532
      %2641 = vst [vmem:[%s177 + $0x290] sm:$0xff] %v2533
      %2642 = vst.msk [vmem:[%s177 + $0x298] sm:$0xff] %vm287, %v2534
      %2643 = vst [vmem:[%s177 + $0x2a0] sm:$0xff] %v2535
      %2644 = vst.msk [vmem:[%s177 + $0x2a8] sm:$0xff] %vm287, %v2536
      %2645 = vst [vmem:[%s177 + $0x2b0] sm:$0xff] %v2537
      %2646 = vst.msk [vmem:[%s177 + $0x2b8] sm:$0xff] %vm287, %v2538
      %2647 = vst [vmem:[%s177 + $0x2c0] sm:$0xff] %v2539
      %2648 = vst.msk [vmem:[%s177 + $0x2c8] sm:$0xff] %vm287, %v2540
      %2649 = vst [vmem:[%s177 + $0x2d0] sm:$0xff] %v2541
      %2650 = vst.msk [vmem:[%s177 + $0x2d8] sm:$0xff] %vm287, %v2542
      %2651 = vst [vmem:[%s177 + $0x2e0] sm:$0xff] %v2543
      %2652 = vst.msk [vmem:[%s177 + $0x2e8] sm:$0xff] %vm287, %v2544
      %2653 = vst [vmem:[%s177 + $0x2f0] sm:$0xff] %v2545
      %2654 = vst.msk [vmem:[%s177 + $0x2f8] sm:$0xff] %vm287, %v2546
      %2655 = vst [vmem:[%s177 + $0x300] sm:$0xff] %v2547
      %2656 = vst.msk [vmem:[%s177 + $0x308] sm:$0xff] %vm287, %v2548
      %2657 = vst [vmem:[%s177 + $0x310] sm:$0xff] %v2549
      %2658 = vst.msk [vmem:[%s177 + $0x318] sm:$0xff] %vm287, %v2550
      %2659 = vst [vmem:[%s177 + $0x320] sm:$0xff] %v2551
      %2660 = vst.msk [vmem:[%s177 + $0x328] sm:$0xff] %vm287, %v2552
      %2661 = vst [vmem:[%s177 + $0x330] sm:$0xff] %v2553
      %2662 = vst.msk [vmem:[%s177 + $0x338] sm:$0xff] %vm287, %v2554
      %2663 = vst [vmem:[%s177 + $0x340] sm:$0xff] %v2555
      %2664 = vst.msk [vmem:[%s177 + $0x348] sm:$0xff] %vm287, %v2556
      %2665 = vst [vmem:[%s177 + $0x350] sm:$0xff] %v2557
      %2666 = vst.msk [vmem:[%s177 + $0x358] sm:$0xff] %vm287, %v2558
      %s2667 = smul.u32 54, %s14
      %p2668 = scmp.lt.s32.totalorder %s2667, 107
      %s2669 = scalar_select %p2668, %s2667, 107
      %s2670 = smul.addr %s2669, 2
      %s2671 = smul.addr %s2670, 8
      %s2672 = scalar_lea.vmem %s3, %s2671
      // Predicated region
      $region33: #{tpu_custom_call.1} parent=31 // pred_check
        %p2673 = pneg %p100
      $region34: #{tpu_custom_call.1} parent=31 // pred_check_branch
        %2675 = sbr.rel (%p2673) target = $region36
      $region35: #{tpu_custom_call.1} parent=31 // pred_region
        %s2676 = smul.u32 54, %s14
      $region36: #{tpu_custom_call.1} parent=31 // pred_fallthru
        _
    $region32: #{tpu_custom_call.1} parent=5 // pred_fallthru
      _
    %p2677 = scmp.le.s32.totalorder 2, %s9
    // Predicated region
    $region37: #{tpu_custom_call.1} parent=5 // pred_check
      %p2678 = pneg %p2677
    $region38: #{tpu_custom_call.1} parent=5 // pred_check_branch
      %2680 = sbr.rel (%p2678) target = $region40
    $region39: #{tpu_custom_call.1} parent=5 // pred_region
      %s2681 = ssub.s32 %s9, 2
      // Predicated region
      $region41: #{tpu_custom_call.1} parent=39 // pred_check
        %p2682 = pneg %p106
      $region42: #{tpu_custom_call.1} parent=39 // pred_check_branch
        %2684 = sbr.rel (%p2682) target = $region44
      $region43: #{tpu_custom_call.1} parent=39 // pred_region
        %s2685 = smul.u32 54, %s15
        %p2686 = scmp.lt.s32.totalorder %s2685, 107
        %s2687 = scalar_select %p2686, %s2685, 107
        %s2688 = smul.addr %s2687, 2
        %s2689 = smul.addr %s2688, 8
        %s2690 = scalar_lea.vmem %s3, %s2689
      $region44: #{tpu_custom_call.1} parent=39 // pred_fallthru
        _
    $region40: #{tpu_custom_call.1} parent=5 // pred_fallthru
      _
  $region6: #{tpu_custom_call.1} parent=0 // loop_footer
    %s13 = sadd.s32 1, %s9
  $region7: #{tpu_custom_call.1} parent=0 // loop_footer_branch
    %8 = sbr.rel target = $region3
  $region8: #{tpu_custom_call.1} parent=0 // loop_exit
    _

</llo_original>
